<compile_context>
chip_gen: v5e
topology: v5e:2x2
jax: 0.10.0
libtpu: 0.0.40
codegen_flags: <defaults>
</compile_context>

<pallas_src>
import jax
import jax.numpy as jnp
from jax import lax
from jax.experimental import pallas as pl
from jax.experimental.pallas import tpu as pltpu

# ----- config (stand-in for the repo-level `args`) -----
CE = 32          # args.Ce : character-embedding dim
CX = 16          # args.Cx : encoder hidden dim
K_BANK = 16      # conv-bank kernel sizes 1..16
N_HIGHWAY = 4
BN_EPS = 1e-5
# Scoped-VMEM cap: above v5e's 16 MiB default, below v7x's 64 MiB physical.
VMEM_LIMIT = 48 * 1024 * 1024


# ===========================================================================
# Kernel 1: PreNet + conv bank + maxpool + projections + residual + highways
#           + GRU input-gate matmul (both directions).  Grid over batch.
# ===========================================================================

def _cbhg_gates_kernel(x_ref, pw1_ref, pb1_ref, pw2_ref, pb2_ref,
                       wb_ref, bb_ref, w1_ref, b1_ref, w2_ref, b2_ref,
                       hww_ref, hwb_ref, wih_ref, bih_ref,
                       gx_ref,
                       xp_scr, cols_scr, mp_scr, slab1_scr, p1_scr, slab2_scr):
    t_len = x_ref.shape[1]
    cx = CX
    kcx = K_BANK * CX
    lp = K_BANK // 2                       # left zero-pad rows for 16-tap bank

    # ---- PreNet: Linear+ReLU, Linear+ReLU (Dropout = identity in eval) ----
    x = x_ref[0]                                                    # (T, Ce)
    h = jnp.dot(x, pw1_ref[...], preferred_element_type=jnp.float32) + pb1_ref[...]
    h = jnp.maximum(h, 0.0)
    pre = jnp.dot(h, pw2_ref[...], preferred_element_type=jnp.float32) + pb2_ref[...]
    pre = jnp.maximum(pre, 0.0)                                     # (T, Cx)

    # Zero-padded copy of the PreNet output for the 16-tap fused conv bank.
    xp_scr[0:lp, :] = jnp.zeros((lp, cx), jnp.float32)
    xp_scr[lp + t_len:lp + t_len + (K_BANK - lp), :] = jnp.zeros(
        (K_BANK - lp, cx), jnp.float32)
    xp_scr[lp:lp + t_len, :] = pre

    # ---- conv bank: im2col via 16 direct VMEM stores + ONE 256x256 matmul ----
    for d in range(K_BANK):
        cols_scr[:, d * cx:(d + 1) * cx] = xp_scr[d:d + t_len, :]
    bank = jnp.dot(cols_scr[...], wb_ref[...], preferred_element_type=jnp.float32)
    bank = jnp.maximum(bank + bb_ref[...], 0.0)                     # (T, 256)

    # ---- MaxPool1d(2, s=1, pad=1)[:, :, :-1]  ->  out[t] = max(in[t-1], in[t]).
    # bank is post-ReLU (>= 0) so the zero-pad row is equivalent to -inf pad.
    mp_scr[0:1, :] = jnp.zeros((1, kcx), jnp.float32)
    mp_scr[t_len + 1:t_len + 2, :] = jnp.zeros((1, kcx), jnp.float32)
    mp_scr[1:t_len + 1, :] = bank
    mp = jnp.maximum(mp_scr[1:t_len + 1, :], mp_scr[0:t_len, :])    # (T, 256)
    mp_scr[1:t_len + 1, :] = mp                                     # pad rows stay 0

    # ---- projection conv 1 (k=3, bias-free, BN folded, ReLU): one K=768 dot ----
    for d in range(3):
        slab1_scr[:, d * kcx:(d + 1) * kcx] = mp_scr[d:d + t_len, :]
    p1 = jnp.dot(slab1_scr[...], w1_ref[...], preferred_element_type=jnp.float32)
    p1 = jnp.maximum(p1 + b1_ref[...], 0.0)                         # (T, Cx)

    # ---- projection conv 2 (k=3, bias-free, BN folded, linear): one K=48 dot ----
    p1_scr[0:1, :] = jnp.zeros((1, cx), jnp.float32)
    p1_scr[t_len + 1:t_len + 2, :] = jnp.zeros((1, cx), jnp.float32)
    p1_scr[1:t_len + 1, :] = p1
    for d in range(3):
        slab2_scr[:, d * cx:(d + 1) * cx] = p1_scr[d:d + t_len, :]
    p2 = jnp.dot(slab2_scr[...], w2_ref[...], preferred_element_type=jnp.float32)
    p2 = p2 + b2_ref[...]

    # ---- residual with the PreNet output (still live in VMEM/vregs) ----
    y = p2 + pre                                                    # (T, Cx)

    # ---- 4 highway layers: one fused (wh|wt) matmul per layer ----
    for i in range(N_HIGHWAY):
        ht = jnp.dot(y, hww_ref[i], preferred_element_type=jnp.float32) + hwb_ref[i]
        hpart = jnp.maximum(ht[:, :cx], 0.0)
        tgate = jax.nn.sigmoid(ht[:, cx:])
        y = hpart * tgate + y * (1.0 - tgate)

    # ---- GRU input gates, BOTH directions: (T,16)@(16,96), lane-dense store ----
    gx = jnp.dot(y, wih_ref[...], preferred_element_type=jnp.float32) + bih_ref[...]
    gx_ref[0] = gx.astype(gx_ref.dtype)


def cbhg_gates(x, fp):
    n, t, ce = x.shape
    kcx = K_BANK * CX
    # TODO(synk): process several batch rows per grid step (raises MXU fill and
    # amortizes the ~0.35us/step overhead) once the VMEM budget is parameterized.
    return pl.pallas_call(
        _cbhg_gates_kernel,
        out_shape=jax.ShapeDtypeStruct((n, t, 6 * CX), jnp.float32),
        grid=(n,),
        in_specs=[
            pl.BlockSpec((1, t, ce), lambda b: (b, 0, 0)),             # x
            pl.BlockSpec((ce, CX), lambda b: (0, 0)),                  # prenet w1
            pl.BlockSpec((1, CX), lambda b: (0, 0)),                   # prenet b1
            pl.BlockSpec((CX, CX), lambda b: (0, 0)),                  # prenet w2
            pl.BlockSpec((1, CX), lambda b: (0, 0)),                   # prenet b2
            pl.BlockSpec((kcx, kcx), lambda b: (0, 0)),                # fused bank W
            pl.BlockSpec((1, kcx), lambda b: (0, 0)),                  # fused bank b
            pl.BlockSpec((3 * kcx, CX), lambda b: (0, 0)),             # proj1 W (768,16)
            pl.BlockSpec((1, CX), lambda b: (0, 0)),                   # proj1 shift
            pl.BlockSpec((3 * CX, CX), lambda b: (0, 0)),              # proj2 W (48,16)
            pl.BlockSpec((1, CX), lambda b: (0, 0)),                   # proj2 shift
            pl.BlockSpec((N_HIGHWAY, CX, 2 * CX), lambda b: (0, 0, 0)),  # highway W
            pl.BlockSpec((N_HIGHWAY, 1, 2 * CX), lambda b: (0, 0, 0)),   # highway b
            pl.BlockSpec((CX, 6 * CX), lambda b: (0, 0)),              # GRU W_ih fwd|bwd
            pl.BlockSpec((1, 6 * CX), lambda b: (0, 0)),               # GRU b_ih fwd|bwd
        ],
        out_specs=pl.BlockSpec((1, t, 6 * CX), lambda b: (b, 0, 0)),
        scratch_shapes=[
            pltpu.VMEM((t + K_BANK, CX), jnp.float32),      # zero-padded PreNet out
            pltpu.VMEM((t, kcx), jnp.float32),              # bank im2col columns
            pltpu.VMEM((t + 2, kcx), jnp.float32),          # maxpool / proj1 pad
            pltpu.VMEM((t, 3 * kcx), jnp.float32),          # proj1 slab (T,768)
            pltpu.VMEM((t + 2, CX), jnp.float32),           # proj2 pad
            pltpu.VMEM((t, 3 * CX), jnp.float32),           # proj2 slab (T,48)
        ],
        compiler_params=pltpu.CompilerParams(
            dimension_semantics=("parallel",),
            vmem_limit_bytes=VMEM_LIMIT),
    )(x, fp["pre_w1"], fp["pre_b1"], fp["pre_w2"], fp["pre_b2"],
      fp["bank_w"], fp["bank_b"], fp["proj1_w"], fp["proj1_b"],
      fp["proj2_w"], fp["proj2_b"], fp["hw_w"], fp["hw_b"],
      fp["gru_wih"], fp["gru_bih"])


# ===========================================================================
# Kernel 2: bidirectional GRU recurrence (shared gates, pre-reversed bwd out).
# ===========================================================================

def _bigru_kernel(gx_ref, whh_ref, bhh_ref, out_ref, hn_ref,
                  gxt_scr, outf_scr, outb_scr):
    n_b = gx_ref.shape[0]
    t_len = gx_ref.shape[1]
    h = CX

    # In-VMEM relayout to time-major (static per-batch copies; no HBM pass).
    for b in range(n_b):
        gxt_scr[:, b, :] = gx_ref[b]

    whh_f = whh_ref[0]                          # (H, 3H), hoisted out of the loop
    whh_b = whh_ref[1]
    bhh_f = bhh_ref[0]                          # (1, 3H)
    bhh_b = bhh_ref[1]

    def step(t, carry):
        h_f, h_b = carry
        g_f = gxt_scr[t][:, :3 * h]                     # fwd gates at time t
        g_b = gxt_scr[t_len - 1 - t][:, 3 * h:]         # bwd gates at time T-1-t
        hh_f = jnp.dot(h_f, whh_f, preferred_element_type=jnp.float32) + bhh_f
        hh_b = jnp.dot(h_b, whh_b, preferred_element_type=jnp.float32) + bhh_b
        # forward direction (PyTorch gate order r, z, n)
        r_f = jax.nn.sigmoid(g_f[:, :h] + hh_f[:, :h])
        z_f = jax.nn.sigmoid(g_f[:, h:2 * h] + hh_f[:, h:2 * h])
        n_f = jnp.tanh(g_f[:, 2 * h:] + r_f * hh_f[:, 2 * h:])
        h_f_new = (1.0 - z_f) * n_f + z_f * h_f
        # backward direction
        r_b = jax.nn.sigmoid(g_b[:, :h] + hh_b[:, :h])
        z_b = jax.nn.sigmoid(g_b[:, h:2 * h] + hh_b[:, h:2 * h])
        n_bw = jnp.tanh(g_b[:, 2 * h:] + r_b * hh_b[:, 2 * h:])
        h_b_new = (1.0 - z_b) * n_bw + z_b * h_b
        outf_scr[t] = h_f_new                           # fwd output at t
        outb_scr[t_len - 1 - t] = h_b_new               # bwd output pre-reversed
        return (h_f_new, h_b_new)

    init = (jnp.zeros((n_b, h), jnp.float32), jnp.zeros((n_b, h), jnp.float32))
    h_f_last, h_b_last = lax.fori_loop(0, t_len, step, init)

    # Assemble the batch-major (N, T, 2H) output in VMEM: no wrapper-side
    # reverse / concat / transpose HBM passes.
    for b in range(n_b):
        out_ref[b] = jnp.concatenate([outf_scr[:, b, :], outb_scr[:, b, :]], axis=-1)
    hn_ref[0] = h_f_last
    hn_ref[1] = h_b_last


def bigru(gx, whh, bhh):
    n, t, _ = gx.shape
    # TODO(synk): for long sequences / v7x, stream gx time-chunks with
    # pltpu.make_async_copy and split fwd/bwd directions across the two cores.
    return pl.pallas_call(
        _bigru_kernel,
        out_shape=(jax.ShapeDtypeStruct((n, t, 2 * CX), jnp.float32),
                   jax.ShapeDtypeStruct((2, n, CX), jnp.float32)),
        in_specs=[pl.BlockSpec(memory_space=pltpu.MemorySpace.VMEM)] * 3,
        out_specs=(pl.BlockSpec(memory_space=pltpu.MemorySpace.VMEM),
                   pl.BlockSpec(memory_space=pltpu.MemorySpace.VMEM)),
        scratch_shapes=[pltpu.VMEM((t, n, 6 * CX), jnp.float32),   # time-major gates
                        pltpu.VMEM((t, n, CX), jnp.float32),       # fwd outputs
                        pltpu.VMEM((t, n, CX), jnp.float32)],      # bwd outputs
        compiler_params=pltpu.CompilerParams(vmem_limit_bytes=VMEM_LIMIT),
    )(gx, whh, bhh)


# ===========================================================================
# Parameter init (deterministic, synthetic) and folding into fused layouts.
# ===========================================================================

def init_params(key):
    keys = iter(jax.random.split(key, 128))

    def nrm(shape, s=0.1):
        return (s * jax.random.normal(next(keys), shape)).astype(jnp.float32)

    p = {}
    # PreNet: Linear(Ce,Cx)+ReLU+Dropout + Linear(Cx,Cx)+ReLU+Dropout
    p["pre_w1"], p["pre_b1"] = nrm((CE, CX)), nrm((CX,))
    p["pre_w2"], p["pre_b2"] = nrm((CX, CX)), nrm((CX,))
    # Conv bank: kernel sizes 1..K, each Conv1d(Cx, Cx, k) + BN + relu
    p["bank"] = [dict(w=nrm((CX, CX, k)), b=nrm((CX,)),
                      gamma=1.0 + nrm((CX,)), beta=nrm((CX,)))
                 for k in range(1, K_BANK + 1)]
    # Projection: Conv1d(K*Cx,Cx,3,relu,bias=False,bn) ; Conv1d(Cx,Cx,3,bias=False,bn)
    p["proj1_w"], p["proj1_gamma"], p["proj1_beta"] = (
        nrm((CX, K_BANK * CX, 3)), 1.0 + nrm((CX,)), nrm((CX,)))
    p["proj2_w"], p["proj2_gamma"], p["proj2_beta"] = (
        nrm((CX, CX, 3)), 1.0 + nrm((CX,)), nrm((CX,)))
    # Highway layers
    p["highway"] = [dict(wh=nrm((CX, CX)), bh=nrm((CX,)),
                         wt=nrm((CX, CX)), bt=nrm((CX,)) - 1.0)
                    for _ in range(N_HIGHWAY)]
    # Bidirectional GRU, PyTorch gate order [r, z, n]
    p["gru"] = [dict(w_ih=nrm((3 * CX, CX)), b_ih=nrm((3 * CX,)),
                     w_hh=nrm((3 * CX, CX)), b_hh=nrm((3 * CX,)))
                for _ in range(2)]
    return p


def fold_params(p):
    """One-time folding of BN / kernel-size padding / gate concatenation."""
    fp = {"pre_w1": p["pre_w1"], "pre_b1": p["pre_b1"].reshape(1, -1),
          "pre_w2": p["pre_w2"], "pre_b2": p["pre_b2"].reshape(1, -1)}

    # ---- conv bank: zero-pad every kernel to 16 taps, fold BN, stack ----
    # PyTorch convention: Conv1d(padding=k//2) truncated to T -> out[t] uses
    # x[t - k//2 .. t + k - 1 - k//2]; tap index d = j + (8 - k//2).
    wtaps, bcols = [], []
    for k in range(1, K_BANK + 1):
        bp = p["bank"][k - 1]
        scale = bp["gamma"] / jnp.sqrt(1.0 + BN_EPS)            # running var = 1
        ws = bp["w"] * scale[:, None, None]                     # (Cout, Cin, k)
        lpad = K_BANK // 2 - k // 2
        rpad = K_BANK - lpad - k
        wk = jnp.pad(ws, ((0, 0), (0, 0), (lpad, rpad)))        # (Cout, Cin, 16)
        wtaps.append(jnp.transpose(wk, (2, 1, 0)))              # (16, Cin, Cout)
        bcols.append(bp["beta"] + bp["b"] * scale)              # running mean = 0
    fp["bank_w"] = jnp.concatenate(wtaps, axis=2).reshape(K_BANK * CX, K_BANK * CX)
    fp["bank_b"] = jnp.concatenate(bcols).reshape(1, -1)

    # ---- projection convs (bias=False, BN folded) as single slab matmuls ----
    s1 = p["proj1_gamma"] / jnp.sqrt(1.0 + BN_EPS)
    fp["proj1_w"] = jnp.transpose(p["proj1_w"] * s1[:, None, None],
                                  (2, 1, 0)).reshape(3 * K_BANK * CX, CX)
    fp["proj1_b"] = p["proj1_beta"].reshape(1, -1)
    s2 = p["proj2_gamma"] / jnp.sqrt(1.0 + BN_EPS)
    fp["proj2_w"] = jnp.transpose(p["proj2_w"] * s2[:, None, None],
                                  (2, 1, 0)).reshape(3 * CX, CX)
    fp["proj2_b"] = p["proj2_beta"].reshape(1, -1)

    # ---- highway: concatenate H / T gate weights -> one matmul per layer ----
    fp["hw_w"] = jnp.stack([jnp.concatenate([hp["wh"], hp["wt"]], axis=1)
                            for hp in p["highway"]], axis=0)           # (4, Cx, 2Cx)
    fp["hw_b"] = jnp.stack([jnp.concatenate([hp["bh"], hp["bt"]]).reshape(1, -1)
                            for hp in p["highway"]], axis=0)           # (4, 1, 2Cx)

    # ---- bidirectional GRU: shared-input gate weights (no block-diag zeros) ----
    fp["gru_wih"] = jnp.concatenate([p["gru"][0]["w_ih"].T,
                                     p["gru"][1]["w_ih"].T], axis=1)   # (Cx, 6H)
    fp["gru_bih"] = jnp.concatenate([p["gru"][0]["b_ih"],
                                     p["gru"][1]["b_ih"]]).reshape(1, -1)
    fp["gru_whh"] = jnp.stack([p["gru"][0]["w_hh"].T,
                               p["gru"][1]["w_hh"].T], axis=0)         # (2, H, 3H)
    fp["gru_bhh"] = jnp.stack([p["gru"][0]["b_hh"].reshape(1, -1),
                               p["gru"][1]["b_hh"].reshape(1, -1)], axis=0)
    return fp


# ===========================================================================
# Forward
# ===========================================================================

def context_encoder(fp, x):
    """x: (N, Tx, Ce) -> (y_: (N, Tx, 2*Cx), hidden: (2, N, Cx))."""
    gx = cbhg_gates(x, fp)                                  # (N, T, 6*Cx)
    y_out, hidden = bigru(gx, fp["gru_whh"], fp["gru_bhh"])
    return y_out, hidden


if __name__ == "__main__":
    key = jax.random.PRNGKey(0)
    pkey, xkey = jax.random.split(key)
    params = init_params(pkey)
    fparams = fold_params(params)

    N, T = 2, 8
    x = jax.random.normal(xkey, (N, T, CE), dtype=jnp.float32)

    fwd = jax.jit(context_encoder)
    y, hidden = fwd(fparams, x)
    (y, hidden) = jax.block_until_ready((y, hidden))

    assert y.shape == (N, T, 2 * CX), y.shape
    assert hidden.shape == (2, N, CX), hidden.shape
    assert jnp.all(jnp.isfinite(y)) and jnp.all(jnp.isfinite(hidden))
    print("KERNEL_OK")
</pallas_src>

<mosaic_0001>
module attributes {stable_mosaic.version = 11 : i64} {
  func.func @_cbhg_gates_kernel(%arg0: i32, %arg1: memref<1x8x32xf32, #tpu.memory_space<vmem>>, %arg2: memref<32x16xf32, #tpu.memory_space<vmem>>, %arg3: memref<1x16xf32, #tpu.memory_space<vmem>>, %arg4: memref<16x16xf32, #tpu.memory_space<vmem>>, %arg5: memref<1x16xf32, #tpu.memory_space<vmem>>, %arg6: memref<256x256xf32, #tpu.memory_space<vmem>>, %arg7: memref<1x256xf32, #tpu.memory_space<vmem>>, %arg8: memref<768x16xf32, #tpu.memory_space<vmem>>, %arg9: memref<1x16xf32, #tpu.memory_space<vmem>>, %arg10: memref<48x16xf32, #tpu.memory_space<vmem>>, %arg11: memref<1x16xf32, #tpu.memory_space<vmem>>, %arg12: memref<4x16x32xf32, #tpu.memory_space<vmem>>, %arg13: memref<4x1x32xf32, #tpu.memory_space<vmem>>, %arg14: memref<16x96xf32, #tpu.memory_space<vmem>>, %arg15: memref<1x96xf32, #tpu.memory_space<vmem>>, %arg16: memref<1x8x96xf32, #tpu.memory_space<vmem>>, %arg17: memref<24x16xf32, #tpu.memory_space<vmem>>, %arg18: memref<8x256xf32, #tpu.memory_space<vmem>>, %arg19: memref<10x256xf32, #tpu.memory_space<vmem>>, %arg20: memref<8x768xf32, #tpu.memory_space<vmem>>, %arg21: memref<10x16xf32, #tpu.memory_space<vmem>>, %arg22: memref<8x48xf32, #tpu.memory_space<vmem>>) attributes {dimension_semantics = [#tpu.dimension_semantics<parallel>], iteration_bounds = array<i64: 2>, scalar_prefetch = 0 : i64, scratch_operands = 6 : i64, tpu.core_type = #tpu.core_type<tc>, window_params = [{transform_indices = @transform_0, window_bounds = array<i64: 1, 8, 32>}, {pipeline_mode = #tpu.pipeline_mode<synchronous>, transform_indices = @transform_1, window_bounds = array<i64: 32, 16>}, {pipeline_mode = #tpu.pipeline_mode<synchronous>, transform_indices = @transform_2, window_bounds = array<i64: 1, 16>}, {pipeline_mode = #tpu.pipeline_mode<synchronous>, transform_indices = @transform_3, window_bounds = array<i64: 16, 16>}, {pipeline_mode = #tpu.pipeline_mode<synchronous>, transform_indices = @transform_4, window_bounds = array<i64: 1, 16>}, {pipeline_mode = #tpu.pipeline_mode<synchronous>, transform_indices = @transform_5, window_bounds = array<i64: 256, 256>}, {pipeline_mode = #tpu.pipeline_mode<synchronous>, transform_indices = @transform_6, window_bounds = array<i64: 1, 256>}, {pipeline_mode = #tpu.pipeline_mode<synchronous>, transform_indices = @transform_7, window_bounds = array<i64: 768, 16>}, {pipeline_mode = #tpu.pipeline_mode<synchronous>, transform_indices = @transform_8, window_bounds = array<i64: 1, 16>}, {pipeline_mode = #tpu.pipeline_mode<synchronous>, transform_indices = @transform_9, window_bounds = array<i64: 48, 16>}, {pipeline_mode = #tpu.pipeline_mode<synchronous>, transform_indices = @transform_10, window_bounds = array<i64: 1, 16>}, {pipeline_mode = #tpu.pipeline_mode<synchronous>, transform_indices = @transform_11, window_bounds = array<i64: 4, 16, 32>}, {pipeline_mode = #tpu.pipeline_mode<synchronous>, transform_indices = @transform_12, window_bounds = array<i64: 4, 1, 32>}, {pipeline_mode = #tpu.pipeline_mode<synchronous>, transform_indices = @transform_13, window_bounds = array<i64: 16, 96>}, {pipeline_mode = #tpu.pipeline_mode<synchronous>, transform_indices = @transform_14, window_bounds = array<i64: 1, 96>}, {transform_indices = @transform_15, window_bounds = array<i64: 1, 8, 96>}]} {
    %c0 = arith.constant 0 : index
    %c0_0 = arith.constant 0 : index
    %c0_1 = arith.constant 0 : index
    %0 = vector.load %arg1[%c0, %c0_0, %c0_1] : memref<1x8x32xf32, #tpu.memory_space<vmem>>, vector<1x8x32xf32>
    %1 = vector.shape_cast %0 : vector<1x8x32xf32> to vector<8x32xf32>
    %c0_2 = arith.constant 0 : index
    %c0_3 = arith.constant 0 : index
    %2 = vector.load %arg2[%c0_2, %c0_3] : memref<32x16xf32, #tpu.memory_space<vmem>>, vector<32x16xf32>
    %cst = arith.constant dense<0.000000e+00> : vector<8x16xf32>
    %3 = tpu.matmul %1, %2, %cst {dimension_numbers = #tpu.dot_dimension_numbers<[1], [0], [0], [1], [0, 0, 1, 1], [], []>} : vector<8x32xf32>, vector<32x16xf32>, vector<8x16xf32> -> vector<8x16xf32>
    %c0_4 = arith.constant 0 : index
    %c0_5 = arith.constant 0 : index
    %4 = vector.load %arg3[%c0_4, %c0_5] : memref<1x16xf32, #tpu.memory_space<vmem>>, vector<1x16xf32>
    %5 = vector.broadcast %4 : vector<1x16xf32> to vector<8x16xf32>
    %6 = arith.addf %3, %5 : vector<8x16xf32>
    %cst_6 = arith.constant 0.000000e+00 : f32
    %7 = vector.broadcast %cst_6 : f32 to vector<8x16xf32>
    %8 = arith.maximumf %6, %7 : vector<8x16xf32>
    %c0_7 = arith.constant 0 : index
    %c0_8 = arith.constant 0 : index
    %9 = vector.load %arg4[%c0_7, %c0_8] : memref<16x16xf32, #tpu.memory_space<vmem>>, vector<16x16xf32>
    %cst_9 = arith.constant dense<0.000000e+00> : vector<8x16xf32>
    %10 = tpu.matmul %8, %9, %cst_9 {dimension_numbers = #tpu.dot_dimension_numbers<[1], [0], [0], [1], [0, 0, 1, 1], [], []>} : vector<8x16xf32>, vector<16x16xf32>, vector<8x16xf32> -> vector<8x16xf32>
    %c0_10 = arith.constant 0 : index
    %c0_11 = arith.constant 0 : index
    %11 = vector.load %arg5[%c0_10, %c0_11] : memref<1x16xf32, #tpu.memory_space<vmem>>, vector<1x16xf32>
    %12 = vector.broadcast %11 : vector<1x16xf32> to vector<8x16xf32>
    %13 = arith.addf %10, %12 : vector<8x16xf32>
    %cst_12 = arith.constant 0.000000e+00 : f32
    %14 = vector.broadcast %cst_12 : f32 to vector<8x16xf32>
    %15 = arith.maximumf %13, %14 : vector<8x16xf32>
    %cst_13 = arith.constant 0.000000e+00 : f32
    %16 = vector.broadcast %cst_13 : f32 to vector<8x16xf32>
    %c0_14 = arith.constant 0 : index
    %c0_15 = arith.constant 0 : index
    %17 = vector.load %arg17[%c0_14, %c0_15] : memref<24x16xf32, #tpu.memory_space<vmem>>, vector<8x16xf32>
    tpu.vector_store %arg17[%c0_14, %c0_15], %16 {strides = array<i32>} : memref<24x16xf32, #tpu.memory_space<vmem>>, vector<8x16xf32>,
    %cst_16 = arith.constant 0.000000e+00 : f32
    %18 = vector.broadcast %cst_16 : f32 to vector<8x16xf32>
    %c16 = arith.constant 16 : index
    %c0_17 = arith.constant 0 : index
    %19 = vector.load %arg17[%c16, %c0_17] : memref<24x16xf32, #tpu.memory_space<vmem>>, vector<8x16xf32>
    tpu.vector_store %arg17[%c16, %c0_17], %18 {strides = array<i32>} : memref<24x16xf32, #tpu.memory_space<vmem>>, vector<8x16xf32>,
    %c8 = arith.constant 8 : index
    %c0_18 = arith.constant 0 : index
    %20 = vector.load %arg17[%c8, %c0_18] : memref<24x16xf32, #tpu.memory_space<vmem>>, vector<8x16xf32>
    tpu.vector_store %arg17[%c8, %c0_18], %15 {strides = array<i32>} : memref<24x16xf32, #tpu.memory_space<vmem>>, vector<8x16xf32>,
    %c0_19 = arith.constant 0 : index
    %c0_20 = arith.constant 0 : index
    %21 = vector.load %arg17[%c0_19, %c0_20] : memref<24x16xf32, #tpu.memory_space<vmem>>, vector<8x16xf32>
    %c0_21 = arith.constant 0 : index
    %c0_22 = arith.constant 0 : index
    %22 = vector.load %arg18[%c0_21, %c0_22] : memref<8x256xf32, #tpu.memory_space<vmem>>, vector<8x16xf32>
    tpu.vector_store %arg18[%c0_21, %c0_22], %21 {strides = array<i32>} : memref<8x256xf32, #tpu.memory_space<vmem>>, vector<8x16xf32>,
    %c1 = arith.constant 1 : index
    %c0_23 = arith.constant 0 : index
    %23 = vector.load %arg17[%c1, %c0_23] : memref<24x16xf32, #tpu.memory_space<vmem>>, vector<8x16xf32>
    %c0_24 = arith.constant 0 : index
    %c16_25 = arith.constant 16 : index
    %24 = vector.load %arg18[%c0_24, %c16_25] : memref<8x256xf32, #tpu.memory_space<vmem>>, vector<8x16xf32>
    tpu.vector_store %arg18[%c0_24, %c16_25], %23 {strides = array<i32>} : memref<8x256xf32, #tpu.memory_space<vmem>>, vector<8x16xf32>,
    %c2 = arith.constant 2 : index
    %c0_26 = arith.constant 0 : index
    %25 = vector.load %arg17[%c2, %c0_26] : memref<24x16xf32, #tpu.memory_space<vmem>>, vector<8x16xf32>
    %c0_27 = arith.constant 0 : index
    %c32 = arith.constant 32 : index
    %26 = vector.load %arg18[%c0_27, %c32] : memref<8x256xf32, #tpu.memory_space<vmem>>, vector<8x16xf32>
    tpu.vector_store %arg18[%c0_27, %c32], %25 {strides = array<i32>} : memref<8x256xf32, #tpu.memory_space<vmem>>, vector<8x16xf32>,
    %c3 = arith.constant 3 : index
    %c0_28 = arith.constant 0 : index
    %27 = vector.load %arg17[%c3, %c0_28] : memref<24x16xf32, #tpu.memory_space<vmem>>, vector<8x16xf32>
    %c0_29 = arith.constant 0 : index
    %c48 = arith.constant 48 : index
    %28 = vector.load %arg18[%c0_29, %c48] : memref<8x256xf32, #tpu.memory_space<vmem>>, vector<8x16xf32>
    tpu.vector_store %arg18[%c0_29, %c48], %27 {strides = array<i32>} : memref<8x256xf32, #tpu.memory_space<vmem>>, vector<8x16xf32>,
    %c4 = arith.constant 4 : index
    %c0_30 = arith.constant 0 : index
    %29 = vector.load %arg17[%c4, %c0_30] : memref<24x16xf32, #tpu.memory_space<vmem>>, vector<8x16xf32>
    %c0_31 = arith.constant 0 : index
    %c64 = arith.constant 64 : index
    %30 = vector.load %arg18[%c0_31, %c64] : memref<8x256xf32, #tpu.memory_space<vmem>>, vector<8x16xf32>
    tpu.vector_store %arg18[%c0_31, %c64], %29 {strides = array<i32>} : memref<8x256xf32, #tpu.memory_space<vmem>>, vector<8x16xf32>,
    %c5 = arith.constant 5 : index
    %c0_32 = arith.constant 0 : index
    %31 = vector.load %arg17[%c5, %c0_32] : memref<24x16xf32, #tpu.memory_space<vmem>>, vector<8x16xf32>
    %c0_33 = arith.constant 0 : index
    %c80 = arith.constant 80 : index
    %32 = vector.load %arg18[%c0_33, %c80] : memref<8x256xf32, #tpu.memory_space<vmem>>, vector<8x16xf32>
    tpu.vector_store %arg18[%c0_33, %c80], %31 {strides = array<i32>} : memref<8x256xf32, #tpu.memory_space<vmem>>, vector<8x16xf32>,
    %c6 = arith.constant 6 : index
    %c0_34 = arith.constant 0 : index
    %33 = vector.load %arg17[%c6, %c0_34] : memref<24x16xf32, #tpu.memory_space<vmem>>, vector<8x16xf32>
    %c0_35 = arith.constant 0 : index
    %c96 = arith.constant 96 : index
    %34 = vector.load %arg18[%c0_35, %c96] : memref<8x256xf32, #tpu.memory_space<vmem>>, vector<8x16xf32>
    tpu.vector_store %arg18[%c0_35, %c96], %33 {strides = array<i32>} : memref<8x256xf32, #tpu.memory_space<vmem>>, vector<8x16xf32>,
    %c7 = arith.constant 7 : index
    %c0_36 = arith.constant 0 : index
    %35 = vector.load %arg17[%c7, %c0_36] : memref<24x16xf32, #tpu.memory_space<vmem>>, vector<8x16xf32>
    %c0_37 = arith.constant 0 : index
    %c112 = arith.constant 112 : index
    %36 = vector.load %arg18[%c0_37, %c112] : memref<8x256xf32, #tpu.memory_space<vmem>>, vector<8x16xf32>
    tpu.vector_store %arg18[%c0_37, %c112], %35 {strides = array<i32>} : memref<8x256xf32, #tpu.memory_space<vmem>>, vector<8x16xf32>,
    %c8_38 = arith.constant 8 : index
    %c0_39 = arith.constant 0 : index
    %37 = vector.load %arg17[%c8_38, %c0_39] : memref<24x16xf32, #tpu.memory_space<vmem>>, vector<8x16xf32>
    %c0_40 = arith.constant 0 : index
    %c128 = arith.constant 128 : index
    %38 = vector.load %arg18[%c0_40, %c128] : memref<8x256xf32, #tpu.memory_space<vmem>>, vector<8x16xf32>
    tpu.vector_store %arg18[%c0_40, %c128], %37 {strides = array<i32>} : memref<8x256xf32, #tpu.memory_space<vmem>>, vector<8x16xf32>,
    %c9 = arith.constant 9 : index
    %c0_41 = arith.constant 0 : index
    %39 = vector.load %arg17[%c9, %c0_41] : memref<24x16xf32, #tpu.memory_space<vmem>>, vector<8x16xf32>
    %c0_42 = arith.constant 0 : index
    %c144 = arith.constant 144 : index
    %40 = vector.load %arg18[%c0_42, %c144] : memref<8x256xf32, #tpu.memory_space<vmem>>, vector<8x16xf32>
    tpu.vector_store %arg18[%c0_42, %c144], %39 {strides = array<i32>} : memref<8x256xf32, #tpu.memory_space<vmem>>, vector<8x16xf32>,
    %c10 = arith.constant 10 : index
    %c0_43 = arith.constant 0 : index
    %41 = vector.load %arg17[%c10, %c0_43] : memref<24x16xf32, #tpu.memory_space<vmem>>, vector<8x16xf32>
    %c0_44 = arith.constant 0 : index
    %c160 = arith.constant 160 : index
    %42 = vector.load %arg18[%c0_44, %c160] : memref<8x256xf32, #tpu.memory_space<vmem>>, vector<8x16xf32>
    tpu.vector_store %arg18[%c0_44, %c160], %41 {strides = array<i32>} : memref<8x256xf32, #tpu.memory_space<vmem>>, vector<8x16xf32>,
    %c11 = arith.constant 11 : index
    %c0_45 = arith.constant 0 : index
    %43 = vector.load %arg17[%c11, %c0_45] : memref<24x16xf32, #tpu.memory_space<vmem>>, vector<8x16xf32>
    %c0_46 = arith.constant 0 : index
    %c176 = arith.constant 176 : index
    %44 = vector.load %arg18[%c0_46, %c176] : memref<8x256xf32, #tpu.memory_space<vmem>>, vector<8x16xf32>
    tpu.vector_store %arg18[%c0_46, %c176], %43 {strides = array<i32>} : memref<8x256xf32, #tpu.memory_space<vmem>>, vector<8x16xf32>,
    %c12 = arith.constant 12 : index
    %c0_47 = arith.constant 0 : index
    %45 = vector.load %arg17[%c12, %c0_47] : memref<24x16xf32, #tpu.memory_space<vmem>>, vector<8x16xf32>
    %c0_48 = arith.constant 0 : index
    %c192 = arith.constant 192 : index
    %46 = vector.load %arg18[%c0_48, %c192] : memref<8x256xf32, #tpu.memory_space<vmem>>, vector<8x16xf32>
    tpu.vector_store %arg18[%c0_48, %c192], %45 {strides = array<i32>} : memref<8x256xf32, #tpu.memory_space<vmem>>, vector<8x16xf32>,
    %c13 = arith.constant 13 : index
    %c0_49 = arith.constant 0 : index
    %47 = vector.load %arg17[%c13, %c0_49] : memref<24x16xf32, #tpu.memory_space<vmem>>, vector<8x16xf32>
    %c0_50 = arith.constant 0 : index
    %c208 = arith.constant 208 : index
    %48 = vector.load %arg18[%c0_50, %c208] : memref<8x256xf32, #tpu.memory_space<vmem>>, vector<8x16xf32>
    tpu.vector_store %arg18[%c0_50, %c208], %47 {strides = array<i32>} : memref<8x256xf32, #tpu.memory_space<vmem>>, vector<8x16xf32>,
    %c14 = arith.constant 14 : index
    %c0_51 = arith.constant 0 : index
    %49 = vector.load %arg17[%c14, %c0_51] : memref<24x16xf32, #tpu.memory_space<vmem>>, vector<8x16xf32>
    %c0_52 = arith.constant 0 : index
    %c224 = arith.constant 224 : index
    %50 = vector.load %arg18[%c0_52, %c224] : memref<8x256xf32, #tpu.memory_space<vmem>>, vector<8x16xf32>
    tpu.vector_store %arg18[%c0_52, %c224], %49 {strides = array<i32>} : memref<8x256xf32, #tpu.memory_space<vmem>>, vector<8x16xf32>,
    %c15 = arith.constant 15 : index
    %c0_53 = arith.constant 0 : index
    %51 = vector.load %arg17[%c15, %c0_53] : memref<24x16xf32, #tpu.memory_space<vmem>>, vector<8x16xf32>
    %c0_54 = arith.constant 0 : index
    %c240 = arith.constant 240 : index
    %52 = vector.load %arg18[%c0_54, %c240] : memref<8x256xf32, #tpu.memory_space<vmem>>, vector<8x16xf32>
    tpu.vector_store %arg18[%c0_54, %c240], %51 {strides = array<i32>} : memref<8x256xf32, #tpu.memory_space<vmem>>, vector<8x16xf32>,
    %c0_55 = arith.constant 0 : index
    %c0_56 = arith.constant 0 : index
    %53 = vector.load %arg18[%c0_55, %c0_56] : memref<8x256xf32, #tpu.memory_space<vmem>>, vector<8x256xf32>
    %c0_57 = arith.constant 0 : index
    %c0_58 = arith.constant 0 : index
    %54 = vector.load %arg6[%c0_57, %c0_58] : memref<256x256xf32, #tpu.memory_space<vmem>>, vector<256x256xf32>
    %cst_59 = arith.constant dense<0.000000e+00> : vector<8x256xf32>
    %55 = tpu.matmul %53, %54, %cst_59 {dimension_numbers = #tpu.dot_dimension_numbers<[1], [0], [0], [1], [0, 0, 1, 1], [], []>} : vector<8x256xf32>, vector<256x256xf32>, vector<8x256xf32> -> vector<8x256xf32>
    %c0_60 = arith.constant 0 : index
    %c0_61 = arith.constant 0 : index
    %56 = vector.load %arg7[%c0_60, %c0_61] : memref<1x256xf32, #tpu.memory_space<vmem>>, vector<1x256xf32>
    %57 = vector.broadcast %56 : vector<1x256xf32> to vector<8x256xf32>
    %58 = arith.addf %55, %57 : vector<8x256xf32>
    %cst_62 = arith.constant 0.000000e+00 : f32
    %59 = vector.broadcast %cst_62 : f32 to vector<8x256xf32>
    %60 = arith.maximumf %58, %59 : vector<8x256xf32>
    %cst_63 = arith.constant 0.000000e+00 : f32
    %61 = vector.broadcast %cst_63 : f32 to vector<1x256xf32>
    %c0_64 = arith.constant 0 : index
    %c0_65 = arith.constant 0 : index
    %62 = vector.load %arg19[%c0_64, %c0_65] : memref<10x256xf32, #tpu.memory_space<vmem>>, vector<1x256xf32>
    tpu.vector_store %arg19[%c0_64, %c0_65], %61 {strides = array<i32>} : memref<10x256xf32, #tpu.memory_space<vmem>>, vector<1x256xf32>,
    %cst_66 = arith.constant 0.000000e+00 : f32
    %63 = vector.broadcast %cst_66 : f32 to vector<1x256xf32>
    %c9_67 = arith.constant 9 : index
    %c0_68 = arith.constant 0 : index
    %64 = vector.load %arg19[%c9_67, %c0_68] : memref<10x256xf32, #tpu.memory_space<vmem>>, vector<1x256xf32>
    tpu.vector_store %arg19[%c9_67, %c0_68], %63 {strides = array<i32>} : memref<10x256xf32, #tpu.memory_space<vmem>>, vector<1x256xf32>,
    %c1_69 = arith.constant 1 : index
    %c0_70 = arith.constant 0 : index
    %65 = vector.load %arg19[%c1_69, %c0_70] : memref<10x256xf32, #tpu.memory_space<vmem>>, vector<8x256xf32>
    tpu.vector_store %arg19[%c1_69, %c0_70], %60 {strides = array<i32>} : memref<10x256xf32, #tpu.memory_space<vmem>>, vector<8x256xf32>,
    %c1_71 = arith.constant 1 : index
    %c0_72 = arith.constant 0 : index
    %66 = vector.load %arg19[%c1_71, %c0_72] : memref<10x256xf32, #tpu.memory_space<vmem>>, vector<8x256xf32>
    %c0_73 = arith.constant 0 : index
    %c0_74 = arith.constant 0 : index
    %67 = vector.load %arg19[%c0_73, %c0_74] : memref<10x256xf32, #tpu.memory_space<vmem>>, vector<8x256xf32>
    %68 = arith.maximumf %66, %67 : vector<8x256xf32>
    %c1_75 = arith.constant 1 : index
    %c0_76 = arith.constant 0 : index
    %69 = vector.load %arg19[%c1_75, %c0_76] : memref<10x256xf32, #tpu.memory_space<vmem>>, vector<8x256xf32>
    tpu.vector_store %arg19[%c1_75, %c0_76], %68 {strides = array<i32>} : memref<10x256xf32, #tpu.memory_space<vmem>>, vector<8x256xf32>,
    %c0_77 = arith.constant 0 : index
    %c0_78 = arith.constant 0 : index
    %70 = vector.load %arg19[%c0_77, %c0_78] : memref<10x256xf32, #tpu.memory_space<vmem>>, vector<8x256xf32>
    %c0_79 = arith.constant 0 : index
    %c0_80 = arith.constant 0 : index
    %71 = vector.load %arg20[%c0_79, %c0_80] : memref<8x768xf32, #tpu.memory_space<vmem>>, vector<8x256xf32>
    tpu.vector_store %arg20[%c0_79, %c0_80], %70 {strides = array<i32>} : memref<8x768xf32, #tpu.memory_space<vmem>>, vector<8x256xf32>,
    %c1_81 = arith.constant 1 : index
    %c0_82 = arith.constant 0 : index
    %72 = vector.load %arg19[%c1_81, %c0_82] : memref<10x256xf32, #tpu.memory_space<vmem>>, vector<8x256xf32>
    %c0_83 = arith.constant 0 : index
    %c256 = arith.constant 256 : index
    %73 = vector.load %arg20[%c0_83, %c256] : memref<8x768xf32, #tpu.memory_space<vmem>>, vector<8x256xf32>
    tpu.vector_store %arg20[%c0_83, %c256], %72 {strides = array<i32>} : memref<8x768xf32, #tpu.memory_space<vmem>>, vector<8x256xf32>,
    %c2_84 = arith.constant 2 : index
    %c0_85 = arith.constant 0 : index
    %74 = vector.load %arg19[%c2_84, %c0_85] : memref<10x256xf32, #tpu.memory_space<vmem>>, vector<8x256xf32>
    %c0_86 = arith.constant 0 : index
    %c512 = arith.constant 512 : index
    %75 = vector.load %arg20[%c0_86, %c512] : memref<8x768xf32, #tpu.memory_space<vmem>>, vector<8x256xf32>
    tpu.vector_store %arg20[%c0_86, %c512], %74 {strides = array<i32>} : memref<8x768xf32, #tpu.memory_space<vmem>>, vector<8x256xf32>,
    %c0_87 = arith.constant 0 : index
    %c0_88 = arith.constant 0 : index
    %76 = vector.load %arg20[%c0_87, %c0_88] : memref<8x768xf32, #tpu.memory_space<vmem>>, vector<8x768xf32>
    %c0_89 = arith.constant 0 : index
    %c0_90 = arith.constant 0 : index
    %77 = vector.load %arg8[%c0_89, %c0_90] : memref<768x16xf32, #tpu.memory_space<vmem>>, vector<768x16xf32>
    %cst_91 = arith.constant dense<0.000000e+00> : vector<8x16xf32>
    %78 = tpu.matmul %76, %77, %cst_91 {dimension_numbers = #tpu.dot_dimension_numbers<[1], [0], [0], [1], [0, 0, 1, 1], [], []>} : vector<8x768xf32>, vector<768x16xf32>, vector<8x16xf32> -> vector<8x16xf32>
    %c0_92 = arith.constant 0 : index
    %c0_93 = arith.constant 0 : index
    %79 = vector.load %arg9[%c0_92, %c0_93] : memref<1x16xf32, #tpu.memory_space<vmem>>, vector<1x16xf32>
    %80 = vector.broadcast %79 : vector<1x16xf32> to vector<8x16xf32>
    %81 = arith.addf %78, %80 : vector<8x16xf32>
    %cst_94 = arith.constant 0.000000e+00 : f32
    %82 = vector.broadcast %cst_94 : f32 to vector<8x16xf32>
    %83 = arith.maximumf %81, %82 : vector<8x16xf32>
    %cst_95 = arith.constant 0.000000e+00 : f32
    %84 = vector.broadcast %cst_95 : f32 to vector<1x16xf32>
    %c0_96 = arith.constant 0 : index
    %c0_97 = arith.constant 0 : index
    %85 = vector.load %arg21[%c0_96, %c0_97] : memref<10x16xf32, #tpu.memory_space<vmem>>, vector<1x16xf32>
    tpu.vector_store %arg21[%c0_96, %c0_97], %84 {strides = array<i32>} : memref<10x16xf32, #tpu.memory_space<vmem>>, vector<1x16xf32>,
    %cst_98 = arith.constant 0.000000e+00 : f32
    %86 = vector.broadcast %cst_98 : f32 to vector<1x16xf32>
    %c9_99 = arith.constant 9 : index
    %c0_100 = arith.constant 0 : index
    %87 = vector.load %arg21[%c9_99, %c0_100] : memref<10x16xf32, #tpu.memory_space<vmem>>, vector<1x16xf32>
    tpu.vector_store %arg21[%c9_99, %c0_100], %86 {strides = array<i32>} : memref<10x16xf32, #tpu.memory_space<vmem>>, vector<1x16xf32>,
    %c1_101 = arith.constant 1 : index
    %c0_102 = arith.constant 0 : index
    %88 = vector.load %arg21[%c1_101, %c0_102] : memref<10x16xf32, #tpu.memory_space<vmem>>, vector<8x16xf32>
    tpu.vector_store %arg21[%c1_101, %c0_102], %83 {strides = array<i32>} : memref<10x16xf32, #tpu.memory_space<vmem>>, vector<8x16xf32>,
    %c0_103 = arith.constant 0 : index
    %c0_104 = arith.constant 0 : index
    %89 = vector.load %arg21[%c0_103, %c0_104] : memref<10x16xf32, #tpu.memory_space<vmem>>, vector<8x16xf32>
    %c0_105 = arith.constant 0 : index
    %c0_106 = arith.constant 0 : index
    %90 = vector.load %arg22[%c0_105, %c0_106] : memref<8x48xf32, #tpu.memory_space<vmem>>, vector<8x16xf32>
    tpu.vector_store %arg22[%c0_105, %c0_106], %89 {strides = array<i32>} : memref<8x48xf32, #tpu.memory_space<vmem>>, vector<8x16xf32>,
    %c1_107 = arith.constant 1 : index
    %c0_108 = arith.constant 0 : index
    %91 = vector.load %arg21[%c1_107, %c0_108] : memref<10x16xf32, #tpu.memory_space<vmem>>, vector<8x16xf32>
    %c0_109 = arith.constant 0 : index
    %c16_110 = arith.constant 16 : index
    %92 = vector.load %arg22[%c0_109, %c16_110] : memref<8x48xf32, #tpu.memory_space<vmem>>, vector<8x16xf32>
    tpu.vector_store %arg22[%c0_109, %c16_110], %91 {strides = array<i32>} : memref<8x48xf32, #tpu.memory_space<vmem>>, vector<8x16xf32>,
    %c2_111 = arith.constant 2 : index
    %c0_112 = arith.constant 0 : index
    %93 = vector.load %arg21[%c2_111, %c0_112] : memref<10x16xf32, #tpu.memory_space<vmem>>, vector<8x16xf32>
    %c0_113 = arith.constant 0 : index
    %c32_114 = arith.constant 32 : index
    %94 = vector.load %arg22[%c0_113, %c32_114] : memref<8x48xf32, #tpu.memory_space<vmem>>, vector<8x16xf32>
    tpu.vector_store %arg22[%c0_113, %c32_114], %93 {strides = array<i32>} : memref<8x48xf32, #tpu.memory_space<vmem>>, vector<8x16xf32>,
    %c0_115 = arith.constant 0 : index
    %c0_116 = arith.constant 0 : index
    %95 = vector.load %arg22[%c0_115, %c0_116] : memref<8x48xf32, #tpu.memory_space<vmem>>, vector<8x48xf32>
    %c0_117 = arith.constant 0 : index
    %c0_118 = arith.constant 0 : index
    %96 = vector.load %arg10[%c0_117, %c0_118] : memref<48x16xf32, #tpu.memory_space<vmem>>, vector<48x16xf32>
    %cst_119 = arith.constant dense<0.000000e+00> : vector<8x16xf32>
    %97 = tpu.matmul %95, %96, %cst_119 {dimension_numbers = #tpu.dot_dimension_numbers<[1], [0], [0], [1], [0, 0, 1, 1], [], []>} : vector<8x48xf32>, vector<48x16xf32>, vector<8x16xf32> -> vector<8x16xf32>
    %c0_120 = arith.constant 0 : index
    %c0_121 = arith.constant 0 : index
    %98 = vector.load %arg11[%c0_120, %c0_121] : memref<1x16xf32, #tpu.memory_space<vmem>>, vector<1x16xf32>
    %99 = vector.broadcast %98 : vector<1x16xf32> to vector<8x16xf32>
    %100 = arith.addf %97, %99 : vector<8x16xf32>
    %101 = arith.addf %100, %15 : vector<8x16xf32>
    %c0_122 = arith.constant 0 : index
    %c0_123 = arith.constant 0 : index
    %c0_124 = arith.constant 0 : index
    %102 = vector.load %arg12[%c0_122, %c0_123, %c0_124] : memref<4x16x32xf32, #tpu.memory_space<vmem>>, vector<1x16x32xf32>
    %103 = vector.shape_cast %102 : vector<1x16x32xf32> to vector<16x32xf32>
    %cst_125 = arith.constant dense<0.000000e+00> : vector<8x32xf32>
    %104 = tpu.matmul %101, %103, %cst_125 {dimension_numbers = #tpu.dot_dimension_numbers<[1], [0], [0], [1], [0, 0, 1, 1], [], []>} : vector<8x16xf32>, vector<16x32xf32>, vector<8x32xf32> -> vector<8x32xf32>
    %c0_126 = arith.constant 0 : index
    %c0_127 = arith.constant 0 : index
    %c0_128 = arith.constant 0 : index
    %105 = vector.load %arg13[%c0_126, %c0_127, %c0_128] : memref<4x1x32xf32, #tpu.memory_space<vmem>>, vector<1x1x32xf32>
    %106 = vector.shape_cast %105 : vector<1x1x32xf32> to vector<1x32xf32>
    %107 = vector.broadcast %106 : vector<1x32xf32> to vector<8x32xf32>
    %108 = arith.addf %104, %107 : vector<8x32xf32>
    %109 = vector.extract_strided_slice %108 {offsets = [0, 0], sizes = [8, 16], strides = [1, 1]} : vector<8x32xf32> to vector<8x16xf32>
    %cst_129 = arith.constant 0.000000e+00 : f32
    %110 = vector.broadcast %cst_129 : f32 to vector<8x16xf32>
    %111 = arith.maximumf %109, %110 : vector<8x16xf32>
    %112 = vector.extract_strided_slice %108 {offsets = [0, 16], sizes = [8, 16], strides = [1, 1]} : vector<8x32xf32> to vector<8x16xf32>
    %113 = arith.negf %112 : vector<8x16xf32>
    %114 = math.exp %113 : vector<8x16xf32>
    %cst_130 = arith.constant 1.000000e+00 : f32
    %115 = vector.broadcast %cst_130 : f32 to vector<8x16xf32>
    %116 = arith.addf %115, %114 : vector<8x16xf32>
    %117 = arith.divf %115, %116 : vector<8x16xf32>
    %118 = arith.mulf %111, %117 : vector<8x16xf32>
    %cst_131 = arith.constant 1.000000e+00 : f32
    %119 = vector.broadcast %cst_131 : f32 to vector<8x16xf32>
    %120 = arith.subf %119, %117 : vector<8x16xf32>
    %121 = arith.mulf %101, %120 : vector<8x16xf32>
    %122 = arith.addf %118, %121 : vector<8x16xf32>
    %c1_132 = arith.constant 1 : index
    %c0_133 = arith.constant 0 : index
    %c0_134 = arith.constant 0 : index
    %123 = vector.load %arg12[%c1_132, %c0_133, %c0_134] : memref<4x16x32xf32, #tpu.memory_space<vmem>>, vector<1x16x32xf32>
    %124 = vector.shape_cast %123 : vector<1x16x32xf32> to vector<16x32xf32>
    %cst_135 = arith.constant dense<0.000000e+00> : vector<8x32xf32>
    %125 = tpu.matmul %122, %124, %cst_135 {dimension_numbers = #tpu.dot_dimension_numbers<[1], [0], [0], [1], [0, 0, 1, 1], [], []>} : vector<8x16xf32>, vector<16x32xf32>, vector<8x32xf32> -> vector<8x32xf32>
    %c1_136 = arith.constant 1 : index
    %c0_137 = arith.constant 0 : index
    %c0_138 = arith.constant 0 : index
    %126 = vector.load %arg13[%c1_136, %c0_137, %c0_138] : memref<4x1x32xf32, #tpu.memory_space<vmem>>, vector<1x1x32xf32>
    %127 = vector.shape_cast %126 : vector<1x1x32xf32> to vector<1x32xf32>
    %128 = vector.broadcast %127 : vector<1x32xf32> to vector<8x32xf32>
    %129 = arith.addf %125, %128 : vector<8x32xf32>
    %130 = vector.extract_strided_slice %129 {offsets = [0, 0], sizes = [8, 16], strides = [1, 1]} : vector<8x32xf32> to vector<8x16xf32>
    %cst_139 = arith.constant 0.000000e+00 : f32
    %131 = vector.broadcast %cst_139 : f32 to vector<8x16xf32>
    %132 = arith.maximumf %130, %131 : vector<8x16xf32>
    %133 = vector.extract_strided_slice %129 {offsets = [0, 16], sizes = [8, 16], strides = [1, 1]} : vector<8x32xf32> to vector<8x16xf32>
    %134 = arith.negf %133 : vector<8x16xf32>
    %135 = math.exp %134 : vector<8x16xf32>
    %cst_140 = arith.constant 1.000000e+00 : f32
    %136 = vector.broadcast %cst_140 : f32 to vector<8x16xf32>
    %137 = arith.addf %136, %135 : vector<8x16xf32>
    %138 = arith.divf %136, %137 : vector<8x16xf32>
    %139 = arith.mulf %132, %138 : vector<8x16xf32>
    %cst_141 = arith.constant 1.000000e+00 : f32
    %140 = vector.broadcast %cst_141 : f32 to vector<8x16xf32>
    %141 = arith.subf %140, %138 : vector<8x16xf32>
    %142 = arith.mulf %122, %141 : vector<8x16xf32>
    %143 = arith.addf %139, %142 : vector<8x16xf32>
    %c2_142 = arith.constant 2 : index
    %c0_143 = arith.constant 0 : index
    %c0_144 = arith.constant 0 : index
    %144 = vector.load %arg12[%c2_142, %c0_143, %c0_144] : memref<4x16x32xf32, #tpu.memory_space<vmem>>, vector<1x16x32xf32>
    %145 = vector.shape_cast %144 : vector<1x16x32xf32> to vector<16x32xf32>
    %cst_145 = arith.constant dense<0.000000e+00> : vector<8x32xf32>
    %146 = tpu.matmul %143, %145, %cst_145 {dimension_numbers = #tpu.dot_dimension_numbers<[1], [0], [0], [1], [0, 0, 1, 1], [], []>} : vector<8x16xf32>, vector<16x32xf32>, vector<8x32xf32> -> vector<8x32xf32>
    %c2_146 = arith.constant 2 : index
    %c0_147 = arith.constant 0 : index
    %c0_148 = arith.constant 0 : index
    %147 = vector.load %arg13[%c2_146, %c0_147, %c0_148] : memref<4x1x32xf32, #tpu.memory_space<vmem>>, vector<1x1x32xf32>
    %148 = vector.shape_cast %147 : vector<1x1x32xf32> to vector<1x32xf32>
    %149 = vector.broadcast %148 : vector<1x32xf32> to vector<8x32xf32>
    %150 = arith.addf %146, %149 : vector<8x32xf32>
    %151 = vector.extract_strided_slice %150 {offsets = [0, 0], sizes = [8, 16], strides = [1, 1]} : vector<8x32xf32> to vector<8x16xf32>
    %cst_149 = arith.constant 0.000000e+00 : f32
    %152 = vector.broadcast %cst_149 : f32 to vector<8x16xf32>
    %153 = arith.maximumf %151, %152 : vector<8x16xf32>
    %154 = vector.extract_strided_slice %150 {offsets = [0, 16], sizes = [8, 16], strides = [1, 1]} : vector<8x32xf32> to vector<8x16xf32>
    %155 = arith.negf %154 : vector<8x16xf32>
    %156 = math.exp %155 : vector<8x16xf32>
    %cst_150 = arith.constant 1.000000e+00 : f32
    %157 = vector.broadcast %cst_150 : f32 to vector<8x16xf32>
    %158 = arith.addf %157, %156 : vector<8x16xf32>
    %159 = arith.divf %157, %158 : vector<8x16xf32>
    %160 = arith.mulf %153, %159 : vector<8x16xf32>
    %cst_151 = arith.constant 1.000000e+00 : f32
    %161 = vector.broadcast %cst_151 : f32 to vector<8x16xf32>
    %162 = arith.subf %161, %159 : vector<8x16xf32>
    %163 = arith.mulf %143, %162 : vector<8x16xf32>
    %164 = arith.addf %160, %163 : vector<8x16xf32>
    %c3_152 = arith.constant 3 : index
    %c0_153 = arith.constant 0 : index
    %c0_154 = arith.constant 0 : index
    %165 = vector.load %arg12[%c3_152, %c0_153, %c0_154] : memref<4x16x32xf32, #tpu.memory_space<vmem>>, vector<1x16x32xf32>
    %166 = vector.shape_cast %165 : vector<1x16x32xf32> to vector<16x32xf32>
    %cst_155 = arith.constant dense<0.000000e+00> : vector<8x32xf32>
    %167 = tpu.matmul %164, %166, %cst_155 {dimension_numbers = #tpu.dot_dimension_numbers<[1], [0], [0], [1], [0, 0, 1, 1], [], []>} : vector<8x16xf32>, vector<16x32xf32>, vector<8x32xf32> -> vector<8x32xf32>
    %c3_156 = arith.constant 3 : index
    %c0_157 = arith.constant 0 : index
    %c0_158 = arith.constant 0 : index
    %168 = vector.load %arg13[%c3_156, %c0_157, %c0_158] : memref<4x1x32xf32, #tpu.memory_space<vmem>>, vector<1x1x32xf32>
    %169 = vector.shape_cast %168 : vector<1x1x32xf32> to vector<1x32xf32>
    %170 = vector.broadcast %169 : vector<1x32xf32> to vector<8x32xf32>
    %171 = arith.addf %167, %170 : vector<8x32xf32>
    %172 = vector.extract_strided_slice %171 {offsets = [0, 0], sizes = [8, 16], strides = [1, 1]} : vector<8x32xf32> to vector<8x16xf32>
    %cst_159 = arith.constant 0.000000e+00 : f32
    %173 = vector.broadcast %cst_159 : f32 to vector<8x16xf32>
    %174 = arith.maximumf %172, %173 : vector<8x16xf32>
    %175 = vector.extract_strided_slice %171 {offsets = [0, 16], sizes = [8, 16], strides = [1, 1]} : vector<8x32xf32> to vector<8x16xf32>
    %176 = arith.negf %175 : vector<8x16xf32>
    %177 = math.exp %176 : vector<8x16xf32>
    %cst_160 = arith.constant 1.000000e+00 : f32
    %178 = vector.broadcast %cst_160 : f32 to vector<8x16xf32>
    %179 = arith.addf %178, %177 : vector<8x16xf32>
    %180 = arith.divf %178, %179 : vector<8x16xf32>
    %181 = arith.mulf %174, %180 : vector<8x16xf32>
    %cst_161 = arith.constant 1.000000e+00 : f32
    %182 = vector.broadcast %cst_161 : f32 to vector<8x16xf32>
    %183 = arith.subf %182, %180 : vector<8x16xf32>
    %184 = arith.mulf %164, %183 : vector<8x16xf32>
    %185 = arith.addf %181, %184 : vector<8x16xf32>
    %c0_162 = arith.constant 0 : index
    %c0_163 = arith.constant 0 : index
    %186 = vector.load %arg14[%c0_162, %c0_163] : memref<16x96xf32, #tpu.memory_space<vmem>>, vector<16x96xf32>
    %cst_164 = arith.constant dense<0.000000e+00> : vector<8x96xf32>
    %187 = tpu.matmul %185, %186, %cst_164 {dimension_numbers = #tpu.dot_dimension_numbers<[1], [0], [0], [1], [0, 0, 1, 1], [], []>} : vector<8x16xf32>, vector<16x96xf32>, vector<8x96xf32> -> vector<8x96xf32>
    %c0_165 = arith.constant 0 : index
    %c0_166 = arith.constant 0 : index
    %188 = vector.load %arg15[%c0_165, %c0_166] : memref<1x96xf32, #tpu.memory_space<vmem>>, vector<1x96xf32>
    %189 = vector.broadcast %188 : vector<1x96xf32> to vector<8x96xf32>
    %190 = arith.addf %187, %189 : vector<8x96xf32>
    %c0_167 = arith.constant 0 : index
    %c0_168 = arith.constant 0 : index
    %c0_169 = arith.constant 0 : index
    %191 = vector.load %arg16[%c0_167, %c0_168, %c0_169] : memref<1x8x96xf32, #tpu.memory_space<vmem>>, vector<1x8x96xf32>
    %192 = vector.shape_cast %191 : vector<1x8x96xf32> to vector<8x96xf32>
    %193 = vector.shape_cast %190 : vector<8x96xf32> to vector<1x8x96xf32>
    tpu.vector_store %arg16[%c0_167, %c0_168, %c0_169], %193 {strides = array<i32>} : memref<1x8x96xf32, #tpu.memory_space<vmem>>, vector<1x8x96xf32>,
    return
  }
  func.func @transform_0(%arg0: i32) -> (i32, i32, i32) {
    %c0_i32 = arith.constant 0 : i32
    %c0_i32_0 = arith.constant 0 : i32
    %c0_i32_1 = arith.constant 0 : i32
    return %arg0, %c0_i32, %c0_i32_0 : i32, i32, i32
  }
  func.func @transform_1(%arg0: i32) -> (i32, i32) {
    %c0_i32 = arith.constant 0 : i32
    %c0_i32_0 = arith.constant 0 : i32
    %c0_i32_1 = arith.constant 0 : i32
    return %c0_i32, %c0_i32_0 : i32, i32
  }
  func.func @transform_2(%arg0: i32) -> (i32, i32) {
    %c0_i32 = arith.constant 0 : i32
    %c0_i32_0 = arith.constant 0 : i32
    %c0_i32_1 = arith.constant 0 : i32
    return %c0_i32, %c0_i32_0 : i32, i32
  }
  func.func @transform_3(%arg0: i32) -> (i32, i32) {
    %c0_i32 = arith.constant 0 : i32
    %c0_i32_0 = arith.constant 0 : i32
    %c0_i32_1 = arith.constant 0 : i32
    return %c0_i32, %c0_i32_0 : i32, i32
  }
  func.func @transform_4(%arg0: i32) -> (i32, i32) {
    %c0_i32 = arith.constant 0 : i32
    %c0_i32_0 = arith.constant 0 : i32
    %c0_i32_1 = arith.constant 0 : i32
    return %c0_i32, %c0_i32_0 : i32, i32
  }
  func.func @transform_5(%arg0: i32) -> (i32, i32) {
    %c0_i32 = arith.constant 0 : i32
    %c0_i32_0 = arith.constant 0 : i32
    %c0_i32_1 = arith.constant 0 : i32
    return %c0_i32, %c0_i32_0 : i32, i32
  }
  func.func @transform_6(%arg0: i32) -> (i32, i32) {
    %c0_i32 = arith.constant 0 : i32
    %c0_i32_0 = arith.constant 0 : i32
    %c0_i32_1 = arith.constant 0 : i32
    return %c0_i32, %c0_i32_0 : i32, i32
  }
  func.func @transform_7(%arg0: i32) -> (i32, i32) {
    %c0_i32 = arith.constant 0 : i32
    %c0_i32_0 = arith.constant 0 : i32
    %c0_i32_1 = arith.constant 0 : i32
    return %c0_i32, %c0_i32_0 : i32, i32
  }
  func.func @transform_8(%arg0: i32) -> (i32, i32) {
    %c0_i32 = arith.constant 0 : i32
    %c0_i32_0 = arith.constant 0 : i32
    %c0_i32_1 = arith.constant 0 : i32
    return %c0_i32, %c0_i32_0 : i32, i32
  }
  func.func @transform_9(%arg0: i32) -> (i32, i32) {
    %c0_i32 = arith.constant 0 : i32
    %c0_i32_0 = arith.constant 0 : i32
    %c0_i32_1 = arith.constant 0 : i32
    return %c0_i32, %c0_i32_0 : i32, i32
  }
  func.func @transform_10(%arg0: i32) -> (i32, i32) {
    %c0_i32 = arith.constant 0 : i32
    %c0_i32_0 = arith.constant 0 : i32
    %c0_i32_1 = arith.constant 0 : i32
    return %c0_i32, %c0_i32_0 : i32, i32
  }
  func.func @transform_11(%arg0: i32) -> (i32, i32, i32) {
    %c0_i32 = arith.constant 0 : i32
    %c0_i32_0 = arith.constant 0 : i32
    %c0_i32_1 = arith.constant 0 : i32
    %c0_i32_2 = arith.constant 0 : i32
    return %c0_i32, %c0_i32_0, %c0_i32_1 : i32, i32, i32
  }
  func.func @transform_12(%arg0: i32) -> (i32, i32, i32) {
    %c0_i32 = arith.constant 0 : i32
    %c0_i32_0 = arith.constant 0 : i32
    %c0_i32_1 = arith.constant 0 : i32
    %c0_i32_2 = arith.constant 0 : i32
    return %c0_i32, %c0_i32_0, %c0_i32_1 : i32, i32, i32
  }
  func.func @transform_13(%arg0: i32) -> (i32, i32) {
    %c0_i32 = arith.constant 0 : i32
    %c0_i32_0 = arith.constant 0 : i32
    %c0_i32_1 = arith.constant 0 : i32
    return %c0_i32, %c0_i32_0 : i32, i32
  }
  func.func @transform_14(%arg0: i32) -> (i32, i32) {
    %c0_i32 = arith.constant 0 : i32
    %c0_i32_0 = arith.constant 0 : i32
    %c0_i32_1 = arith.constant 0 : i32
    return %c0_i32, %c0_i32_0 : i32, i32
  }
  func.func @transform_15(%arg0: i32) -> (i32, i32, i32) {
    %c0_i32 = arith.constant 0 : i32
    %c0_i32_0 = arith.constant 0 : i32
    %c0_i32_1 = arith.constant 0 : i32
    return %arg0, %c0_i32, %c0_i32_0 : i32, i32, i32
  }
}

module attributes {stable_mosaic.version = 11 : i64} {
  func.func @_bigru_kernel(%arg0: memref<2x8x96xf32, #tpu.memory_space<vmem>>, %arg1: memref<2x16x48xf32, #tpu.memory_space<vmem>>, %arg2: memref<2x1x48xf32, #tpu.memory_space<vmem>>, %arg3: memref<2x8x32xf32, #tpu.memory_space<vmem>>, %arg4: memref<2x2x16xf32, #tpu.memory_space<vmem>>, %arg5: memref<8x2x96xf32, #tpu.memory_space<vmem>>, %arg6: memref<8x2x16xf32, #tpu.memory_space<vmem>>, %arg7: memref<8x2x16xf32, #tpu.memory_space<vmem>>) attributes {dimension_semantics = [], scalar_prefetch = 0 : i64, scratch_operands = 3 : i64, tpu.core_type = #tpu.core_type<tc>} {
    %c0 = arith.constant 0 : index
    %c0_0 = arith.constant 0 : index
    %c0_1 = arith.constant 0 : index
    %0 = vector.load %arg0[%c0, %c0_0, %c0_1] : memref<2x8x96xf32, #tpu.memory_space<vmem>>, vector<1x8x96xf32>
    %1 = vector.shape_cast %0 : vector<1x8x96xf32> to vector<8x96xf32>
    %c0_2 = arith.constant 0 : index
    %c0_3 = arith.constant 0 : index
    %c0_4 = arith.constant 0 : index
    %2 = vector.load %arg5[%c0_2, %c0_3, %c0_4] : memref<8x2x96xf32, #tpu.memory_space<vmem>>, vector<8x1x96xf32>
    %3 = vector.shape_cast %2 : vector<8x1x96xf32> to vector<8x96xf32>
    %4 = vector.shape_cast %1 : vector<8x96xf32> to vector<8x1x96xf32>
    tpu.vector_store %arg5[%c0_2, %c0_3, %c0_4], %4 {strides = array<i32>} : memref<8x2x96xf32, #tpu.memory_space<vmem>>, vector<8x1x96xf32>,
    %c1 = arith.constant 1 : index
    %c0_5 = arith.constant 0 : index
    %c0_6 = arith.constant 0 : index
    %5 = vector.load %arg0[%c1, %c0_5, %c0_6] : memref<2x8x96xf32, #tpu.memory_space<vmem>>, vector<1x8x96xf32>
    %6 = vector.shape_cast %5 : vector<1x8x96xf32> to vector<8x96xf32>
    %c0_7 = arith.constant 0 : index
    %c1_8 = arith.constant 1 : index
    %c0_9 = arith.constant 0 : index
    %7 = vector.load %arg5[%c0_7, %c1_8, %c0_9] : memref<8x2x96xf32, #tpu.memory_space<vmem>>, vector<8x1x96xf32>
    %8 = vector.shape_cast %7 : vector<8x1x96xf32> to vector<8x96xf32>
    %9 = vector.shape_cast %6 : vector<8x96xf32> to vector<8x1x96xf32>
    tpu.vector_store %arg5[%c0_7, %c1_8, %c0_9], %9 {strides = array<i32>} : memref<8x2x96xf32, #tpu.memory_space<vmem>>, vector<8x1x96xf32>,
    %c0_10 = arith.constant 0 : index
    %c0_11 = arith.constant 0 : index
    %c0_12 = arith.constant 0 : index
    %10 = vector.load %arg1[%c0_10, %c0_11, %c0_12] : memref<2x16x48xf32, #tpu.memory_space<vmem>>, vector<1x16x48xf32>
    %11 = vector.shape_cast %10 : vector<1x16x48xf32> to vector<16x48xf32>
    %c1_13 = arith.constant 1 : index
    %c0_14 = arith.constant 0 : index
    %c0_15 = arith.constant 0 : index
    %12 = vector.load %arg1[%c1_13, %c0_14, %c0_15] : memref<2x16x48xf32, #tpu.memory_space<vmem>>, vector<1x16x48xf32>
    %13 = vector.shape_cast %12 : vector<1x16x48xf32> to vector<16x48xf32>
    %c0_16 = arith.constant 0 : index
    %c0_17 = arith.constant 0 : index
    %c0_18 = arith.constant 0 : index
    %14 = vector.load %arg2[%c0_16, %c0_17, %c0_18] : memref<2x1x48xf32, #tpu.memory_space<vmem>>, vector<1x1x48xf32>
    %15 = vector.shape_cast %14 : vector<1x1x48xf32> to vector<1x48xf32>
    %c1_19 = arith.constant 1 : index
    %c0_20 = arith.constant 0 : index
    %c0_21 = arith.constant 0 : index
    %16 = vector.load %arg2[%c1_19, %c0_20, %c0_21] : memref<2x1x48xf32, #tpu.memory_space<vmem>>, vector<1x1x48xf32>
    %17 = vector.shape_cast %16 : vector<1x1x48xf32> to vector<1x48xf32>
    %cst = arith.constant 0.000000e+00 : f32
    %18 = vector.broadcast %cst : f32 to vector<2x16xf32>
    %cst_22 = arith.constant 0.000000e+00 : f32
    %19 = vector.broadcast %cst_22 : f32 to vector<2x16xf32>
    %c0_i32 = arith.constant 0 : i32
    %c8_i32 = arith.constant 8 : i32
    %20 = arith.addi %c0_i32, %c8_i32 : i32
    %c1_i32 = arith.constant 1 : i32
    %21:2 = scf.for %arg8 = %c0_i32 to %20 step %c1_i32 iter_args(%arg9 = %18, %arg10 = %19) -> (vector<2x16xf32>, vector<2x16xf32>)  : i32 {
      %44 = arith.index_cast %arg8 : i32 to index
      %c0_48 = arith.constant 0 : index
      %c0_49 = arith.constant 0 : index
      %45 = vector.load %arg5[%44, %c0_48, %c0_49] : memref<8x2x96xf32, #tpu.memory_space<vmem>>, vector<1x2x96xf32>
      %46 = vector.shape_cast %45 : vector<1x2x96xf32> to vector<2x96xf32>
      %47 = vector.extract_strided_slice %46 {offsets = [0, 0], sizes = [2, 48], strides = [1, 1]} : vector<2x96xf32> to vector<2x48xf32>
      %c7_i32 = arith.constant 7 : i32
      %48 = arith.subi %c7_i32, %arg8 : i32
      %49 = arith.index_cast %48 : i32 to index
      %c0_50 = arith.constant 0 : index
      %c0_51 = arith.constant 0 : index
      %50 = vector.load %arg5[%49, %c0_50, %c0_51] : memref<8x2x96xf32, #tpu.memory_space<vmem>>, vector<1x2x96xf32>
      %51 = vector.shape_cast %50 : vector<1x2x96xf32> to vector<2x96xf32>
      %52 = vector.extract_strided_slice %51 {offsets = [0, 48], sizes = [2, 48], strides = [1, 1]} : vector<2x96xf32> to vector<2x48xf32>
      %cst_52 = arith.constant dense<0.000000e+00> : vector<2x48xf32>
      %53 = tpu.matmul %arg9, %11, %cst_52 {dimension_numbers = #tpu.dot_dimension_numbers<[1], [0], [0], [1], [0, 0, 1, 1], [], []>} : vector<2x16xf32>, vector<16x48xf32>, vector<2x48xf32> -> vector<2x48xf32>
      %54 = vector.broadcast %15 : vector<1x48xf32> to vector<2x48xf32>
      %55 = arith.addf %53, %54 : vector<2x48xf32>
      %cst_53 = arith.constant dense<0.000000e+00> : vector<2x48xf32>
      %56 = tpu.matmul %arg10, %13, %cst_53 {dimension_numbers = #tpu.dot_dimension_numbers<[1], [0], [0], [1], [0, 0, 1, 1], [], []>} : vector<2x16xf32>, vector<16x48xf32>, vector<2x48xf32> -> vector<2x48xf32>
      %57 = vector.broadcast %17 : vector<1x48xf32> to vector<2x48xf32>
      %58 = arith.addf %56, %57 : vector<2x48xf32>
      %59 = vector.extract_strided_slice %47 {offsets = [0, 0], sizes = [2, 16], strides = [1, 1]} : vector<2x48xf32> to vector<2x16xf32>
      %60 = vector.extract_strided_slice %55 {offsets = [0, 0], sizes = [2, 16], strides = [1, 1]} : vector<2x48xf32> to vector<2x16xf32>
      %61 = arith.addf %59, %60 : vector<2x16xf32>
      %62 = arith.negf %61 : vector<2x16xf32>
      %63 = math.exp %62 : vector<2x16xf32>
      %cst_54 = arith.constant 1.000000e+00 : f32
      %64 = vector.broadcast %cst_54 : f32 to vector<2x16xf32>
      %65 = arith.addf %64, %63 : vector<2x16xf32>
      %66 = arith.divf %64, %65 : vector<2x16xf32>
      %67 = vector.extract_strided_slice %47 {offsets = [0, 16], sizes = [2, 16], strides = [1, 1]} : vector<2x48xf32> to vector<2x16xf32>
      %68 = vector.extract_strided_slice %55 {offsets = [0, 16], sizes = [2, 16], strides = [1, 1]} : vector<2x48xf32> to vector<2x16xf32>
      %69 = arith.addf %67, %68 : vector<2x16xf32>
      %70 = arith.negf %69 : vector<2x16xf32>
      %71 = math.exp %70 : vector<2x16xf32>
      %cst_55 = arith.constant 1.000000e+00 : f32
      %72 = vector.broadcast %cst_55 : f32 to vector<2x16xf32>
      %73 = arith.addf %72, %71 : vector<2x16xf32>
      %74 = arith.divf %72, %73 : vector<2x16xf32>
      %75 = vector.extract_strided_slice %47 {offsets = [0, 32], sizes = [2, 16], strides = [1, 1]} : vector<2x48xf32> to vector<2x16xf32>
      %76 = vector.extract_strided_slice %55 {offsets = [0, 32], sizes = [2, 16], strides = [1, 1]} : vector<2x48xf32> to vector<2x16xf32>
      %77 = arith.mulf %66, %76 : vector<2x16xf32>
      %78 = arith.addf %75, %77 : vector<2x16xf32>
      %79 = math.tanh %78 : vector<2x16xf32>
      %cst_56 = arith.constant 1.000000e+00 : f32
      %80 = vector.broadcast %cst_56 : f32 to vector<2x16xf32>
      %81 = arith.subf %80, %74 : vector<2x16xf32>
      %82 = arith.mulf %81, %79 : vector<2x16xf32>
      %83 = arith.mulf %74, %arg9 : vector<2x16xf32>
      %84 = arith.addf %82, %83 : vector<2x16xf32>
      %85 = vector.extract_strided_slice %52 {offsets = [0, 0], sizes = [2, 16], strides = [1, 1]} : vector<2x48xf32> to vector<2x16xf32>
      %86 = vector.extract_strided_slice %58 {offsets = [0, 0], sizes = [2, 16], strides = [1, 1]} : vector<2x48xf32> to vector<2x16xf32>
      %87 = arith.addf %85, %86 : vector<2x16xf32>
      %88 = arith.negf %87 : vector<2x16xf32>
      %89 = math.exp %88 : vector<2x16xf32>
      %cst_57 = arith.constant 1.000000e+00 : f32
      %90 = vector.broadcast %cst_57 : f32 to vector<2x16xf32>
      %91 = arith.addf %90, %89 : vector<2x16xf32>
      %92 = arith.divf %90, %91 : vector<2x16xf32>
      %93 = vector.extract_strided_slice %52 {offsets = [0, 16], sizes = [2, 16], strides = [1, 1]} : vector<2x48xf32> to vector<2x16xf32>
      %94 = vector.extract_strided_slice %58 {offsets = [0, 16], sizes = [2, 16], strides = [1, 1]} : vector<2x48xf32> to vector<2x16xf32>
      %95 = arith.addf %93, %94 : vector<2x16xf32>
      %96 = arith.negf %95 : vector<2x16xf32>
      %97 = math.exp %96 : vector<2x16xf32>
      %cst_58 = arith.constant 1.000000e+00 : f32
      %98 = vector.broadcast %cst_58 : f32 to vector<2x16xf32>
      %99 = arith.addf %98, %97 : vector<2x16xf32>
      %100 = arith.divf %98, %99 : vector<2x16xf32>
      %101 = vector.extract_strided_slice %52 {offsets = [0, 32], sizes = [2, 16], strides = [1, 1]} : vector<2x48xf32> to vector<2x16xf32>
      %102 = vector.extract_strided_slice %58 {offsets = [0, 32], sizes = [2, 16], strides = [1, 1]} : vector<2x48xf32> to vector<2x16xf32>
      %103 = arith.mulf %92, %102 : vector<2x16xf32>
      %104 = arith.addf %101, %103 : vector<2x16xf32>
      %105 = math.tanh %104 : vector<2x16xf32>
      %cst_59 = arith.constant 1.000000e+00 : f32
      %106 = vector.broadcast %cst_59 : f32 to vector<2x16xf32>
      %107 = arith.subf %106, %100 : vector<2x16xf32>
      %108 = arith.mulf %107, %105 : vector<2x16xf32>
      %109 = arith.mulf %100, %arg10 : vector<2x16xf32>
      %110 = arith.addf %108, %109 : vector<2x16xf32>
      %111 = arith.index_cast %arg8 : i32 to index
      %c0_60 = arith.constant 0 : index
      %c0_61 = arith.constant 0 : index
      %112 = vector.load %arg6[%111, %c0_60, %c0_61] : memref<8x2x16xf32, #tpu.memory_space<vmem>>, vector<1x2x16xf32>
      %113 = vector.shape_cast %112 : vector<1x2x16xf32> to vector<2x16xf32>
      %114 = vector.shape_cast %84 : vector<2x16xf32> to vector<1x2x16xf32>
      tpu.vector_store %arg6[%111, %c0_60, %c0_61], %114 {strides = array<i32>} : memref<8x2x16xf32, #tpu.memory_space<vmem>>, vector<1x2x16xf32>,
      %c7_i32_62 = arith.constant 7 : i32
      %115 = arith.subi %c7_i32_62, %arg8 : i32
      %116 = arith.index_cast %115 : i32 to index
      %c0_63 = arith.constant 0 : index
      %c0_64 = arith.constant 0 : index
      %117 = vector.load %arg7[%116, %c0_63, %c0_64] : memref<8x2x16xf32, #tpu.memory_space<vmem>>, vector<1x2x16xf32>
      %118 = vector.shape_cast %117 : vector<1x2x16xf32> to vector<2x16xf32>
      %119 = vector.shape_cast %110 : vector<2x16xf32> to vector<1x2x16xf32>
      tpu.vector_store %arg7[%116, %c0_63, %c0_64], %119 {strides = array<i32>} : memref<8x2x16xf32, #tpu.memory_space<vmem>>, vector<1x2x16xf32>,
      scf.yield %84, %110 : vector<2x16xf32>, vector<2x16xf32>
    }
    %c8_i32_23 = arith.constant 8 : i32
    %c0_24 = arith.constant 0 : index
    %c0_25 = arith.constant 0 : index
    %c0_26 = arith.constant 0 : index
    %22 = vector.load %arg6[%c0_24, %c0_25, %c0_26] : memref<8x2x16xf32, #tpu.memory_space<vmem>>, vector<8x1x16xf32>
    %23 = vector.shape_cast %22 : vector<8x1x16xf32> to vector<8x16xf32>
    %c0_27 = arith.constant 0 : index
    %c0_28 = arith.constant 0 : index
    %c0_29 = arith.constant 0 : index
    %24 = vector.load %arg7[%c0_27, %c0_28, %c0_29] : memref<8x2x16xf32, #tpu.memory_space<vmem>>, vector<8x1x16xf32>
    %25 = vector.shape_cast %24 : vector<8x1x16xf32> to vector<8x16xf32>
    %26 = tpu.concatenate %23, %25 in 1 : vector<8x16xf32>, vector<8x16xf32> -> vector<8x32xf32>
    %c0_30 = arith.constant 0 : index
    %c0_31 = arith.constant 0 : index
    %c0_32 = arith.constant 0 : index
    %27 = vector.load %arg3[%c0_30, %c0_31, %c0_32] : memref<2x8x32xf32, #tpu.memory_space<vmem>>, vector<1x8x32xf32>
    %28 = vector.shape_cast %27 : vector<1x8x32xf32> to vector<8x32xf32>
    %29 = vector.shape_cast %26 : vector<8x32xf32> to vector<1x8x32xf32>
    tpu.vector_store %arg3[%c0_30, %c0_31, %c0_32], %29 {strides = array<i32>} : memref<2x8x32xf32, #tpu.memory_space<vmem>>, vector<1x8x32xf32>,
    %c0_33 = arith.constant 0 : index
    %c1_34 = arith.constant 1 : index
    %c0_35 = arith.constant 0 : index
    %30 = vector.load %arg6[%c0_33, %c1_34, %c0_35] : memref<8x2x16xf32, #tpu.memory_space<vmem>>, vector<8x1x16xf32>
    %31 = vector.shape_cast %30 : vector<8x1x16xf32> to vector<8x16xf32>
    %c0_36 = arith.constant 0 : index
    %c1_37 = arith.constant 1 : index
    %c0_38 = arith.constant 0 : index
    %32 = vector.load %arg7[%c0_36, %c1_37, %c0_38] : memref<8x2x16xf32, #tpu.memory_space<vmem>>, vector<8x1x16xf32>
    %33 = vector.shape_cast %32 : vector<8x1x16xf32> to vector<8x16xf32>
    %34 = tpu.concatenate %31, %33 in 1 : vector<8x16xf32>, vector<8x16xf32> -> vector<8x32xf32>
    %c1_39 = arith.constant 1 : index
    %c0_40 = arith.constant 0 : index
    %c0_41 = arith.constant 0 : index
    %35 = vector.load %arg3[%c1_39, %c0_40, %c0_41] : memref<2x8x32xf32, #tpu.memory_space<vmem>>, vector<1x8x32xf32>
    %36 = vector.shape_cast %35 : vector<1x8x32xf32> to vector<8x32xf32>
    %37 = vector.shape_cast %34 : vector<8x32xf32> to vector<1x8x32xf32>
    tpu.vector_store %arg3[%c1_39, %c0_40, %c0_41], %37 {strides = array<i32>} : memref<2x8x32xf32, #tpu.memory_space<vmem>>, vector<1x8x32xf32>,
    %c0_42 = arith.constant 0 : index
    %c0_43 = arith.constant 0 : index
    %c0_44 = arith.constant 0 : index
    %38 = vector.load %arg4[%c0_42, %c0_43, %c0_44] : memref<2x2x16xf32, #tpu.memory_space<vmem>>, vector<1x2x16xf32>
    %39 = vector.shape_cast %38 : vector<1x2x16xf32> to vector<2x16xf32>
    %40 = vector.shape_cast %21#0 : vector<2x16xf32> to vector<1x2x16xf32>
    tpu.vector_store %arg4[%c0_42, %c0_43, %c0_44], %40 {strides = array<i32>} : memref<2x2x16xf32, #tpu.memory_space<vmem>>, vector<1x2x16xf32>,
    %c1_45 = arith.constant 1 : index
    %c0_46 = arith.constant 0 : index
    %c0_47 = arith.constant 0 : index
    %41 = vector.load %arg4[%c1_45, %c0_46, %c0_47] : memref<2x2x16xf32, #tpu.memory_space<vmem>>, vector<1x2x16xf32>
    %42 = vector.shape_cast %41 : vector<1x2x16xf32> to vector<2x16xf32>
    %43 = vector.shape_cast %21#1 : vector<2x16xf32> to vector<1x2x16xf32>
    tpu.vector_store %arg4[%c1_45, %c0_46, %c0_47], %43 {strides = array<i32>} : memref<2x2x16xf32, #tpu.memory_space<vmem>>, vector<1x2x16xf32>,
    return
  }
}

</mosaic_0001>

<llo_original>
// kernel: context_encoder.3
$region0: #{context_encoder.3}
  #allocation0 [shape = 'u32[]', space=smem, size = 0x4, offset = 0x4, fixed_abs, tag = 'smem constant byte address 0x4 - core index']
  #allocation1 [shape = 'u32[72,128]{1,0:T(1,128)}', space=vmem, size = 0x9000, scoped, tag = 'internal scratch']
  #allocation2 [shape = 'f32[8,2,96]{2,1,0:T(2,128)}', space=vmem, size = 0x2000, scoped, tag = 'scratch operand']
  #allocation3 [shape = 'f32[8,2,16]{2,1,0:T(2,128)}', space=vmem, size = 0x2000, scoped, tag = 'scratch operand']
  #allocation4 [shape = 'f32[8,2,16]{2,1,0:T(2,128)}', space=vmem, size = 0x2000, scoped, tag = 'scratch operand']
  %s0 = inlined_call_operand.vmem [shape: f32[2,8,96], index: 0, kind: input, shape index: {}]
  %s1 = inlined_call_operand.vmem [shape: f32[2,16,48], index: 1, kind: input, shape index: {}]
  %s2 = inlined_call_operand.vmem [shape: f32[2,1,48], index: 2, kind: input, shape index: {}]
  %s3 = inlined_call_operand.hbm [shape: f32[2,8,32], index: 3, kind: output, shape index: {0}]
  %s4 = inlined_call_operand.hbm [shape: f32[2,2,16], index: 4, kind: output, shape index: {1}]
  %5 = xla_tuple %s3, %s4
  %s6 = sld [smem:[#allocation0]]
  $region37: #{context_encoder.3} parent=0
    _
  %s8 = ssub.s32 1, %s6
  %s9 = scalar_select 0, %s8, %s6
  $region1: #{context_encoder.3} parent=0
    #allocation5 [shape = 'u8[8192]{0}', space=vmem, size = 0x2000, scoped, tag = 'output window, operand 0, single buffered']
    #allocation6 [shape = 's32[1]{0}', space=sflag, size = 0x4, scoped, tag = 'scoped memory for context_encoder.3']
    #allocation7 [shape = 'u8[2048]{0}', space=vmem, size = 0x800, scoped, tag = 'output window, operand 1, single buffered']
    #allocation8 [shape = 's32[1]{0}', space=sflag, size = 0x4, scoped, tag = 'scoped memory for context_encoder.3']
    %10 = vsyncpa [#allocation6], 0
    %11 = vsyncpa [#allocation8], 0
    // Predicated region
    $region2: #{context_encoder.3} parent=1 // pred_check
      _
    $region3: #{context_encoder.3} parent=1 // pred_check_branch
      %13 = sbr.rel (0) target = $region5
    $region4: #{context_encoder.3} parent=1 // pred_region
      _
    $region5: #{context_encoder.3} parent=1 // pred_fallthru
      _
    // Predicated region
    $region6: #{context_encoder.3} parent=1 // pred_check
      _
    $region7: #{context_encoder.3} parent=1 // pred_check_branch
      %15 = sbr.rel (0) target = $region9
    $region8: #{context_encoder.3} parent=1 // pred_region
      _
    $region9: #{context_encoder.3} parent=1 // pred_fallthru
      _
    // Predicated region
    $region10: #{context_encoder.3} parent=1 // pred_check
      _
    $region11: #{context_encoder.3} parent=1 // pred_check_branch
      %17 = sbr.rel (0) target = $region13
    $region12: #{context_encoder.3} parent=1 // pred_region
      _
    $region13: #{context_encoder.3} parent=1 // pred_fallthru
      _
    %v18 = vld [vmem:[%s0] sm:$0xff]
    %v20 = vrot.slane %v18, 1
    %v21 = vrot.slane %v18, 2
    %v22 = vrot.slane %v18, 3
    %v23 = vrot.slane %v18, 4
    %v24 = vrot.slane %v18, 5
    %v25 = vrot.slane %v18, 6
    %v26 = vrot.slane %v18, 7
    %vm34 = vcmask 778240
    %35 = vst.msk [vmem:[#allocation2] sm:$0x1] %vm34, %v18
    %36 = vst.msk [vmem:[#allocation2 + $0x2] sm:$0x1] %vm34, %v20
    %37 = vst.msk [vmem:[#allocation2 + $0x4] sm:$0x1] %vm34, %v21
    %38 = vst.msk [vmem:[#allocation2 + $0x6] sm:$0x1] %vm34, %v22
    %39 = vst.msk [vmem:[#allocation2 + $0x8] sm:$0x1] %vm34, %v23
    %40 = vst.msk [vmem:[#allocation2 + $0xa] sm:$0x1] %vm34, %v24
    %41 = vst.msk [vmem:[#allocation2 + $0xc] sm:$0x1] %vm34, %v25
    %42 = vst.msk [vmem:[#allocation2 + $0xe] sm:$0x1] %vm34, %v26
    %s43 = scalar_lea.vmem %s0, 8
    %v44 = vld [vmem:[%s43] sm:$0xff]
    %v46 = vrot.slane %v44, 1
    %v47 = vrot.slane %v44, 2
    %v48 = vrot.slane %v44, 3
    %v49 = vrot.slane %v44, 4
    %v50 = vrot.slane %v44, 5
    %v51 = vrot.slane %v44, 6
    %v52 = vrot.slane %v44, 7
    %60 = vst.msk [vmem:[#allocation2 + $0x1] sm:$0x1] %vm34, %v44
    %61 = vst.msk [vmem:[#allocation2 + $0x3] sm:$0x1] %vm34, %v46
    %62 = vst.msk [vmem:[#allocation2 + $0x5] sm:$0x1] %vm34, %v47
    %63 = vst.msk [vmem:[#allocation2 + $0x7] sm:$0x1] %vm34, %v48
    %64 = vst.msk [vmem:[#allocation2 + $0x9] sm:$0x1] %vm34, %v49
    %65 = vst.msk [vmem:[#allocation2 + $0xb] sm:$0x1] %vm34, %v50
    %66 = vst.msk [vmem:[#allocation2 + $0xd] sm:$0x1] %vm34, %v51
    %67 = vst.msk [vmem:[#allocation2 + $0xf] sm:$0x1] %vm34, %v52
    %v68 = vld [vmem:[%s1] sm:$0xff]
    %v69 = vld [vmem:[%s1 + $0x8] sm:$0xff]
    %s70 = scalar_lea.vmem %s1, 16
    %v71 = vld [vmem:[%s70] sm:$0xff]
    %v72 = vld [vmem:[%s70 + $0x8] sm:$0xff]
    %v73 = vld [vmem:[%s2] sm:$0x1]
    %s74 = scalar_lea.vmem %s2, 1
    %v75 = vld [vmem:[%s74] sm:$0x1]
    loop: start=0, step=1, limit=8
    $region14: #{context_encoder.3} parent=1 // loop_pre_header
      _
    $region15: #{context_encoder.3} parent=1 // loop_header
      %s77 = sphi 0, %s81
      %p78 = scmp.ge.s32.totalorder %s77, 8
      %v82 = vphi 0.0, %v186
      %v83 = vphi 0.0, %v228
    $region16: #{context_encoder.3} parent=1 // loop_header_branch
      %80 = sbr.rel (%p78) target = $region20
    $region17: #{context_encoder.3} parent=1 // loop_body
      %s84 = smul.u32 %s77, 2
      %s85 = scalar_lea.vmem [#allocation2], %s84
      %v86 = vld [vmem:[%s85] sm:$0x3]
      %s87 = ssub.s32 7, %s77
      %s88 = smul.u32 %s87, 2
      %s89 = scalar_lea.vmem [#allocation2], %s88
      %v90 = vld [vmem:[%s89] sm:$0x3]
      %v92 = vperm.slane %v73, 0
      %95 = vrot.lane.b32.xlu0 %v82, 112
      %v96 = vpop.permute.xlu0 %95
      %vm97 = vcmask 130048
      %v98 = vsel %vm97, %v96, 0
      %100 = vmatpush.msra.mxu0 0.0
      %101 = vmatpush.msra.mxu0 0.0
      %102 = vmatpush.msra.mxu0 0.0
      %103 = vmatpush.msra.mxu0 0.0
      %104 = vmatpush.msra.mxu0 0.0
      %105 = vmatpush.msra.mxu0 0.0
      %106 = vmatpush.msra.mxu0 0.0
      %107 = vmatpush.msra.mxu0 0.0
      %108 = vmatpush.msra.mxu0 0.0
      %109 = vmatpush.msra.mxu0 0.0
      %110 = vmatpush.msra.mxu0 0.0
      %111 = vmatpush.msra.mxu0 0.0
      %112 = vmatpush.msra.mxu0 0.0
      %113 = vmatpush.msra.mxu0 0.0
      %114 = vmatpush.msra.mxu0 %v69
      %115 = vmatpush.msra.mxu0 %v68
      %116 = vmatmul.f32.gmra.mxu0 %v98
      %v117 = vpop.f32.mrf.mxu0
      %v118 = vadd.f32 %v92, %v117
      %119 = vdwg.mxu0
      %v121 = vperm.slane %v75, 0
      %124 = vrot.lane.b32.xlu0 %v83, 64
      %v125 = vpop.permute.xlu0 %124
      %v126 = vsel %vm97, %v125, 0
      %128 = vmatpush.msra.mxu0 0.0
      %129 = vmatpush.msra.mxu0 0.0
      %130 = vmatpush.msra.mxu0 0.0
      %131 = vmatpush.msra.mxu0 0.0
      %132 = vmatpush.msra.mxu0 0.0
      %133 = vmatpush.msra.mxu0 0.0
      %134 = vmatpush.msra.mxu0 0.0
      %135 = vmatpush.msra.mxu0 0.0
      %136 = vmatpush.msra.mxu0 0.0
      %137 = vmatpush.msra.mxu0 0.0
      %138 = vmatpush.msra.mxu0 0.0
      %139 = vmatpush.msra.mxu0 0.0
      %140 = vmatpush.msra.mxu0 0.0
      %141 = vmatpush.msra.mxu0 0.0
      %142 = vmatpush.msra.mxu0 %v72
      %143 = vmatpush.msra.mxu0 %v71
      %144 = vmatmul.f32.gmra.mxu0 %v126
      %v145 = vpop.f32.mrf.mxu0
      %v146 = vadd.f32 %v121, %v145
      %147 = vdwg.mxu0
      %v148 = vadd.f32 %v86, %v118
      %v149 = vxor.u32 %v148, 2147483648
      %v150 = vmul.f32 %v149, 1.442695
      %v151 = vpow.pop %v150
      %v152 = vadd.f32 %v151, 1.0
      %v153 = vrcp.pop %v152
      %v154 = vmul.f32 %v152, %v153
      %v155 = vsub.f32 1.0, %v154
      %v156 = vmul.f32 %v153, %v155
      %v157 = vadd.f32 %v153, %v156
      %vm158 = vweird.f32 %v152
      %vm159 = vweird.f32 %v153
      %vm160 = vmor %vm158, %vm159
      %v161 = vsel %vm160, %v153, %v157
      %v162 = vand.u32 2147483647, %v152
      %vm163 = vcmp.eq.f32.partialorder %v162, 8.507059e+37
      %v164 = vand.u32 %v152, 2147483648
      %v165 = vor.u32 1.1754944e-38, %v164
      %v166 = vsel %vm163, %v165, %v161
      %v167 = vmul.f32 1.0, %v166
      %169 = vrot.lane.b32.xlu0 %v118, 96
      %v170 = vpop.permute.xlu0 %169
      %v172 = vmul.f32 %v167, %v170
      %174 = vrot.lane.b32.xlu0 %v172, 32
      %v175 = vpop.permute.xlu0 %174
      %v177 = vadd.f32 %v86, %v175
      %v178 = vtanh.pop %v177
      %v179 = vsub.f32 1.0, %v167
      %181 = vrot.lane.b32.xlu0 %v178, 112
      %v182 = vpop.permute.xlu0 %181
      %v184 = vmul.f32 %v179, %v182
      %v185 = vmul.f32 %v167, %v82
      %v186 = vadd.f32 %v184, %v185
      %188 = vrot.lane.b32.xlu0 %v146, 48
      %v189 = vpop.permute.xlu0 %188
      %v191 = vadd.f32 %v90, %v189
      %v192 = vxor.u32 %v191, 2147483648
      %v193 = vmul.f32 %v192, 1.442695
      %v194 = vpow.pop %v193
      %v195 = vadd.f32 %v194, 1.0
      %v196 = vrcp.pop %v195
      %v197 = vmul.f32 %v195, %v196
      %v198 = vsub.f32 1.0, %v197
      %v199 = vmul.f32 %v196, %v198
      %v200 = vadd.f32 %v196, %v199
      %vm201 = vweird.f32 %v195
      %vm202 = vweird.f32 %v196
      %vm203 = vmor %vm201, %vm202
      %v204 = vsel %vm203, %v196, %v200
      %v205 = vand.u32 2147483647, %v195
      %vm206 = vcmp.eq.f32.partialorder %v205, 8.507059e+37
      %v207 = vand.u32 %v195, 2147483648
      %v208 = vor.u32 1.1754944e-38, %v207
      %v209 = vsel %vm206, %v208, %v204
      %v210 = vmul.f32 1.0, %v209
      %211 = vrot.lane.b32.xlu0 %v146, 16
      %v212 = vpop.permute.xlu0 %211
      %v214 = vmul.f32 %v210, %v212
      %216 = vrot.lane.b32.xlu0 %v214, 32
      %v217 = vpop.permute.xlu0 %216
      %v219 = vadd.f32 %v90, %v217
      %v220 = vtanh.pop %v219
      %v221 = vsub.f32 1.0, %v210
      %223 = vrot.lane.b32.xlu0 %v220, 112
      %v224 = vpop.permute.xlu0 %223
      %v226 = vmul.f32 %v221, %v224
      %v227 = vmul.f32 %v210, %v83
      %v228 = vadd.f32 %v226, %v227
      %230 = vrot.lane.b32.xlu0 %v186, 112
      %v231 = vpop.permute.xlu0 %230
      %s233 = scalar_lea.vmem [#allocation3], %s84
      %vm234 = vcmask 123904
      %235 = vst.msk [vmem:[%s233] sm:$0x3] %vm234, %v231
      %237 = vrot.lane.b32.xlu0 %v228, 64
      %v238 = vpop.permute.xlu0 %237
      %s240 = scalar_lea.vmem [#allocation4], %s88
      %241 = vst.msk [vmem:[%s240] sm:$0x3] %vm234, %v238
    $region18: #{context_encoder.3} parent=1 // loop_footer
      %s81 = sadd.s32 1, %s77
    $region19: #{context_encoder.3} parent=1 // loop_footer_branch
      %76 = sbr.rel target = $region15
    $region20: #{context_encoder.3} parent=1 // loop_exit
      _
    %v242 = vld [vmem:[#allocation3] sm:$0x1]
    %v243 = vld [vmem:[#allocation3 + $0x2] sm:$0x1]
    %v244 = vld [vmem:[#allocation3 + $0x4] sm:$0x1]
    %v245 = vld [vmem:[#allocation3 + $0x6] sm:$0x1]
    %v246 = vld [vmem:[#allocation3 + $0x8] sm:$0x1]
    %v247 = vld [vmem:[#allocation3 + $0xa] sm:$0x1]
    %v248 = vld [vmem:[#allocation3 + $0xc] sm:$0x1]
    %v249 = vld [vmem:[#allocation3 + $0xe] sm:$0x1]
    %v250 = vld [vmem:[#allocation4] sm:$0x1]
    %v251 = vld [vmem:[#allocation4 + $0x2] sm:$0x1]
    %v252 = vld [vmem:[#allocation4 + $0x4] sm:$0x1]
    %v253 = vld [vmem:[#allocation4 + $0x6] sm:$0x1]
    %v254 = vld [vmem:[#allocation4 + $0x8] sm:$0x1]
    %v255 = vld [vmem:[#allocation4 + $0xa] sm:$0x1]
    %v256 = vld [vmem:[#allocation4 + $0xc] sm:$0x1]
    %v257 = vld [vmem:[#allocation4 + $0xe] sm:$0x1]
    %v266 = vrot.slane %v243, 7
    %vm267 = vcmask 1041409
    %v268 = vsel %vm267, %v266, %v242
    %v269 = vrot.slane %v244, 6
    %vm270 = vcmask 1042434
    %v271 = vsel %vm270, %v269, %v268
    %v272 = vrot.slane %v245, 5
    %vm273 = vcmask 1043459
    %v274 = vsel %vm273, %v272, %v271
    %v275 = vrot.slane %v246, 4
    %vm276 = vcmask 1044484
    %v277 = vsel %vm276, %v275, %v274
    %v278 = vrot.slane %v247, 3
    %vm279 = vcmask 1045509
    %v280 = vsel %vm279, %v278, %v277
    %v281 = vrot.slane %v248, 2
    %vm282 = vcmask 1046534
    %v283 = vsel %vm282, %v281, %v280
    %v284 = vrot.slane %v249, 1
    %vm285 = vcmask 1047559
    %v286 = vsel %vm285, %v284, %v283
    %v296 = vrot.slane %v251, 7
    %v297 = vsel %vm267, %v296, %v250
    %v298 = vrot.slane %v252, 6
    %v299 = vsel %vm270, %v298, %v297
    %v300 = vrot.slane %v253, 5
    %v301 = vsel %vm273, %v300, %v299
    %v302 = vrot.slane %v254, 4
    %v303 = vsel %vm276, %v302, %v301
    %v304 = vrot.slane %v255, 3
    %v305 = vsel %vm279, %v304, %v303
    %v306 = vrot.slane %v256, 2
    %v307 = vsel %vm282, %v306, %v305
    %v308 = vrot.slane %v257, 1
    %v309 = vsel %vm285, %v308, %v307
    %310 = vrot.lane.b32.xlu0 %v309, 16
    %v311 = vpop.permute.xlu0 %310
    %vm313 = vcmask 130048
    %v314 = vsel %vm313, %v286, %v311
    %vm315 = vcmask 261120
    %316 = vst.msk [vmem:[#allocation5] sm:$0xff] %vm315, %v314
    %v317 = vld [vmem:[#allocation3 + $0x1] sm:$0x1]
    %v318 = vld [vmem:[#allocation3 + $0x3] sm:$0x1]
    %v319 = vld [vmem:[#allocation3 + $0x5] sm:$0x1]
    %v320 = vld [vmem:[#allocation3 + $0x7] sm:$0x1]
    %v321 = vld [vmem:[#allocation3 + $0x9] sm:$0x1]
    %v322 = vld [vmem:[#allocation3 + $0xb] sm:$0x1]
    %v323 = vld [vmem:[#allocation3 + $0xd] sm:$0x1]
    %v324 = vld [vmem:[#allocation3 + $0xf] sm:$0x1]
    %v325 = vld [vmem:[#allocation4 + $0x1] sm:$0x1]
    %v326 = vld [vmem:[#allocation4 + $0x3] sm:$0x1]
    %v327 = vld [vmem:[#allocation4 + $0x5] sm:$0x1]
    %v328 = vld [vmem:[#allocation4 + $0x7] sm:$0x1]
    %v329 = vld [vmem:[#allocation4 + $0x9] sm:$0x1]
    %v330 = vld [vmem:[#allocation4 + $0xb] sm:$0x1]
    %v331 = vld [vmem:[#allocation4 + $0xd] sm:$0x1]
    %v332 = vld [vmem:[#allocation4 + $0xf] sm:$0x1]
    %v341 = vrot.slane %v318, 7
    %v342 = vsel %vm267, %v341, %v317
    %v343 = vrot.slane %v319, 6
    %v344 = vsel %vm270, %v343, %v342
    %v345 = vrot.slane %v320, 5
    %v346 = vsel %vm273, %v345, %v344
    %v347 = vrot.slane %v321, 4
    %v348 = vsel %vm276, %v347, %v346
    %v349 = vrot.slane %v322, 3
    %v350 = vsel %vm279, %v349, %v348
    %v351 = vrot.slane %v323, 2
    %v352 = vsel %vm282, %v351, %v350
    %v353 = vrot.slane %v324, 1
    %v354 = vsel %vm285, %v353, %v352
    %v364 = vrot.slane %v326, 7
    %v365 = vsel %vm267, %v364, %v325
    %v366 = vrot.slane %v327, 6
    %v367 = vsel %vm270, %v366, %v365
    %v368 = vrot.slane %v328, 5
    %v369 = vsel %vm273, %v368, %v367
    %v370 = vrot.slane %v329, 4
    %v371 = vsel %vm276, %v370, %v369
    %v372 = vrot.slane %v330, 3
    %v373 = vsel %vm279, %v372, %v371
    %v374 = vrot.slane %v331, 2
    %v375 = vsel %vm282, %v374, %v373
    %v376 = vrot.slane %v332, 1
    %v377 = vsel %vm285, %v376, %v375
    %378 = vrot.lane.b32.xlu0 %v377, 16
    %v379 = vpop.permute.xlu0 %378
    %v381 = vsel %vm313, %v354, %v379
    %s382 = scalar_lea.vmem [#allocation5], 8
    %383 = vst.msk [vmem:[%s382] sm:$0xff] %vm315, %v381
    %385 = vrot.lane.b32.xlu0 %v82, 112
    %v386 = vpop.permute.xlu0 %385
    %vm388 = vcmask 123904
    %389 = vst.msk [vmem:[#allocation7] sm:$0x3] %vm388, %v386
    %391 = vrot.lane.b32.xlu0 %v83, 64
    %v392 = vpop.permute.xlu0 %391
    %s394 = scalar_lea.vmem [#allocation7], 2
    %395 = vst.msk [vmem:[%s394] sm:$0x3] %vm388, %v392
    // Predicated region
    $region21: #{context_encoder.3} parent=1 // pred_check
      _
    $region22: #{context_encoder.3} parent=1 // pred_check_branch
      %397 = sbr.rel (0) target = $region24
    $region23: #{context_encoder.3} parent=1 // pred_region
      %399 = vsyncadd [#allocation6], 0
      %s400 = sshll.u32 [#allocation5], 4
      %s401 = int_to_ptr.vmem [resolvable:$true] %s400
      %s402 = sshll.u32 %s3, 4
      %s403 = int_to_ptr.hbm [resolvable:$true] %s402
      %408 = dma.vmem_to_hbm [thread:$0]  %s401, 256, %s403, [#allocation6], 128, 128, 8
    $region24: #{context_encoder.3} parent=1 // pred_fallthru
      _
    // Predicated region
    $region25: #{context_encoder.3} parent=1 // pred_check
      _
    $region26: #{context_encoder.3} parent=1 // pred_check_branch
      %410 = sbr.rel (0) target = $region28
    $region27: #{context_encoder.3} parent=1 // pred_region
      %412 = vsyncadd [#allocation8], 0
      %s413 = sshll.u32 [#allocation7], 4
      %s414 = int_to_ptr.vmem [resolvable:$true] %s413
      %s415 = sshll.u32 %s4, 4
      %s416 = int_to_ptr.hbm [resolvable:$true] %s415
      %421 = dma.vmem_to_hbm [thread:$0]  %s414, 64, %s416, [#allocation8], 32, 32, 2
    $region28: #{context_encoder.3} parent=1 // pred_fallthru
      _
    // Predicated region
    $region29: #{context_encoder.3} parent=1 // pred_check
      _
    $region30: #{context_encoder.3} parent=1 // pred_check_branch
      %423 = sbr.rel (0) target = $region32
    $region31: #{context_encoder.3} parent=1 // pred_region
      %425 = dma.done [#allocation6], 256
    $region32: #{context_encoder.3} parent=1 // pred_fallthru
      _
    // Predicated region
    $region33: #{context_encoder.3} parent=1 // pred_check
      _
    $region34: #{context_encoder.3} parent=1 // pred_check_branch
      %427 = sbr.rel (0) target = $region36
    $region35: #{context_encoder.3} parent=1 // pred_region
      %429 = dma.done [#allocation8], 64
    $region36: #{context_encoder.3} parent=1 // pred_fallthru
      _
    %430 = vsyncpa [#allocation6], 1
    %431 = vsyncpa [#allocation8], 1

// kernel: context_encoder.2
$region0: #{context_encoder.2}
  #allocation0 [shape = 'u32[]', space=smem, size = 0x4, offset = 0x4, fixed_abs, tag = 'smem constant byte address 0x4 - core index']
  #allocation1 [shape = 'u32[72,128]{1,0:T(1,128)}', space=vmem, size = 0x9000, scoped, tag = 'internal scratch']
  #allocation2 [shape = 'f32[24,16]{1,0:T(8,128)}', space=vmem, size = 0x3000, scoped, tag = 'scratch operand']
  #allocation3 [shape = 'f32[8,256]{1,0:T(8,128)}', space=vmem, size = 0x2000, scoped, tag = 'scratch operand']
  #allocation4 [shape = 'f32[10,256]{1,0:T(8,128)}', space=vmem, size = 0x4000, scoped, tag = 'scratch operand']
  #allocation5 [shape = 'f32[8,768]{1,0:T(8,128)}', space=vmem, size = 0x6000, scoped, tag = 'scratch operand']
  #allocation6 [shape = 'f32[10,16]{1,0:T(8,128)}', space=vmem, size = 0x2000, scoped, tag = 'scratch operand']
  #allocation7 [shape = 'f32[8,48]{1,0:T(8,128)}', space=vmem, size = 0x1000, scoped, tag = 'scratch operand']
  %s0 = inlined_call_operand.vmem [shape: f32[2,8,32], index: 0, kind: input, shape index: {}]
  %s1 = inlined_call_operand.vmem [shape: f32[32,16], index: 1, kind: input, shape index: {}]
  %s2 = inlined_call_operand.vmem [shape: f32[1,16], index: 2, kind: input, shape index: {}]
  %s3 = inlined_call_operand.vmem [shape: f32[16,16], index: 3, kind: input, shape index: {}]
  %s4 = inlined_call_operand.vmem [shape: f32[1,16], index: 4, kind: input, shape index: {}]
  %s5 = inlined_call_operand.vmem [shape: f32[256,256], index: 5, kind: input, shape index: {}]
  %s6 = inlined_call_operand.vmem [shape: f32[1,256], index: 6, kind: input, shape index: {}]
  %s7 = inlined_call_operand.vmem [shape: f32[768,16], index: 7, kind: input, shape index: {}]
  %s8 = inlined_call_operand.vmem [shape: f32[1,16], index: 8, kind: input, shape index: {}]
  %s9 = inlined_call_operand.vmem [shape: f32[48,16], index: 9, kind: input, shape index: {}]
  %s10 = inlined_call_operand.vmem [shape: f32[1,16], index: 10, kind: input, shape index: {}]
  %s11 = inlined_call_operand.vmem [shape: f32[4,16,32], index: 11, kind: input, shape index: {}]
  %s12 = inlined_call_operand.vmem [shape: f32[4,1,32], index: 12, kind: input, shape index: {}]
  %s13 = inlined_call_operand.vmem [shape: f32[16,96], index: 13, kind: input, shape index: {}]
  %s14 = inlined_call_operand.vmem [shape: f32[1,96], index: 14, kind: input, shape index: {}]
  %s15 = inlined_call_operand.vmem [shape: f32[2,8,96], index: 15, kind: output, shape index: {}]
  %s16 = sld [smem:[#allocation0]]
  $region93: #{context_encoder.2} parent=0
    _
  %s18 = ssub.s32 1, %s16
  %s19 = scalar_select 0, %s18, %s16
  loop: start=0, step=1, limit=4
  $region2: #{context_encoder.2} parent=0 // loop_pre_header
    _
  $region3: #{context_encoder.2} parent=0 // loop_header
    %s21 = sphi 0, %s25
    %p22 = scmp.ge.s32.totalorder %s21, 4
    %s31 = sphi 0, %s33
    %s34 = sphi 0, %s31
    %s35 = sphi 0, %s34
    %s51 = sphi 0, %s35
    %s55 = sphi 0, %s55
    %s57 = sphi 0, %s55
    %s58 = sphi 0, %s57
    %s72 = sphi 0, %s58
    %s76 = sphi 0, %s76
    %s78 = sphi 0, %s76
    %s79 = sphi 0, %s78
    %s93 = sphi 0, %s79
    %s97 = sphi 0, %s97
    %s99 = sphi 0, %s97
    %s100 = sphi 0, %s99
    %s114 = sphi 0, %s100
    %s118 = sphi 0, %s118
    %s120 = sphi 0, %s118
    %s121 = sphi 0, %s120
    %s135 = sphi 0, %s121
    %s139 = sphi 0, %s139
    %s141 = sphi 0, %s139
    %s142 = sphi 0, %s141
    %s156 = sphi 0, %s142
    %s160 = sphi 0, %s160
    %s162 = sphi 0, %s160
    %s163 = sphi 0, %s162
    %s177 = sphi 0, %s163
    %s181 = sphi 0, %s181
    %s183 = sphi 0, %s181
    %s184 = sphi 0, %s183
    %s198 = sphi 0, %s184
    %s202 = sphi 0, %s202
    %s204 = sphi 0, %s202
    %s205 = sphi 0, %s204
    %s219 = sphi 0, %s205
    %s223 = sphi 0, %s223
    %s225 = sphi 0, %s223
    %s226 = sphi 0, %s225
    %s240 = sphi 0, %s226
    %s244 = sphi 0, %s244
    %s246 = sphi 0, %s244
    %s247 = sphi 0, %s246
    %s261 = sphi 0, %s247
    %s265 = sphi 0, %s265
    %s267 = sphi 0, %s265
    %s268 = sphi 0, %s267
    %s282 = sphi 0, %s268
    %s286 = sphi 0, %s286
    %s288 = sphi 0, %s286
    %s289 = sphi 0, %s288
    %s303 = sphi 0, %s289
    %s307 = sphi 0, %s307
    %s309 = sphi 0, %s307
    %s310 = sphi 0, %s309
    %s324 = sphi 0, %s310
    %s328 = sphi 0, %s328
    %s330 = sphi 0, %s328
    %s331 = sphi 0, %s330
    %s345 = sphi 0, %s331
    %s351 = sphi 0, %s353
    %s354 = sphi 0, %s351
    %s355 = sphi 0, %s354
    %s371 = sphi 0, %s355
  $region4: #{context_encoder.2} parent=0 // loop_header_branch
    %24 = sbr.rel (%p22) target = $region8
  $region5: #{context_encoder.2} parent=0 // loop_body
    %s26 = ssub.s32 %s21, 1
    %s27 = ssub.s32 %s21, 2
    %s28 = sadd.s32 %s21, 1
    %s29 = ssub.s32 %s21, %s28
    %p30 = scmp.eq.s32.totalorder %s29, 0
    %s32 = sadd.s32 %s31, 1
    %s33 = scalar_select %p30, %s31, %s32
    %p36 = pneg %p30
    %p37 = scmp.eq.s32.totalorder %s21, 1
    %p38 = por %p36, %p37
    %p39 = scmp.ne.s32.totalorder %s31, %s34
    %p40 = scmp.eq.s32.totalorder %s21, 0
    %p41 = por %p39, %p40
    %p42 = scmp.ne.s32.totalorder %s31, %s34
    %p43 = scmp.eq.s32.totalorder %s26, 1
    %p44 = por %p42, %p43
    %p45 = scmp.ne.s32.totalorder %s34, %s35
    %p46 = scmp.eq.s32.totalorder %s26, 0
    %p47 = por %p45, %p46
    %p48 = scmp.ne.s32.totalorder %s34, %s35
    %p49 = scmp.eq.s32.totalorder %s27, 1
    %p50 = por %p48, %p49
    %p52 = scmp.ne.s32.totalorder %s35, %s51
    %p53 = scmp.eq.s32.totalorder %s27, 0
    %p54 = por %p52, %p53
    %s56 = sadd.s32 %s55, 1
    %p59 = scmp.eq.s32.totalorder %s21, 1
    %p60 = scmp.ne.s32.totalorder %s55, %s57
    %p61 = scmp.eq.s32.totalorder %s21, 0
    %p62 = por %p60, %p61
    %p63 = scmp.ne.s32.totalorder %s55, %s57
    %p64 = scmp.eq.s32.totalorder %s26, 1
    %p65 = por %p63, %p64
    %p66 = scmp.ne.s32.totalorder %s57, %s58
    %p67 = scmp.eq.s32.totalorder %s26, 0
    %p68 = por %p66, %p67
    %p69 = scmp.ne.s32.totalorder %s57, %s58
    %p70 = scmp.eq.s32.totalorder %s27, 1
    %p71 = por %p69, %p70
    %p73 = scmp.ne.s32.totalorder %s58, %s72
    %p74 = scmp.eq.s32.totalorder %s27, 0
    %p75 = por %p73, %p74
    %s77 = sadd.s32 %s76, 1
    %p80 = scmp.eq.s32.totalorder %s21, 1
    %p81 = scmp.ne.s32.totalorder %s76, %s78
    %p82 = scmp.eq.s32.totalorder %s21, 0
    %p83 = por %p81, %p82
    %p84 = scmp.ne.s32.totalorder %s76, %s78
    %p85 = scmp.eq.s32.totalorder %s26, 1
    %p86 = por %p84, %p85
    %p87 = scmp.ne.s32.totalorder %s78, %s79
    %p88 = scmp.eq.s32.totalorder %s26, 0
    %p89 = por %p87, %p88
    %p90 = scmp.ne.s32.totalorder %s78, %s79
    %p91 = scmp.eq.s32.totalorder %s27, 1
    %p92 = por %p90, %p91
    %p94 = scmp.ne.s32.totalorder %s79, %s93
    %p95 = scmp.eq.s32.totalorder %s27, 0
    %p96 = por %p94, %p95
    %s98 = sadd.s32 %s97, 1
    %p101 = scmp.eq.s32.totalorder %s21, 1
    %p102 = scmp.ne.s32.totalorder %s97, %s99
    %p103 = scmp.eq.s32.totalorder %s21, 0
    %p104 = por %p102, %p103
    %p105 = scmp.ne.s32.totalorder %s97, %s99
    %p106 = scmp.eq.s32.totalorder %s26, 1
    %p107 = por %p105, %p106
    %p108 = scmp.ne.s32.totalorder %s99, %s100
    %p109 = scmp.eq.s32.totalorder %s26, 0
    %p110 = por %p108, %p109
    %p111 = scmp.ne.s32.totalorder %s99, %s100
    %p112 = scmp.eq.s32.totalorder %s27, 1
    %p113 = por %p111, %p112
    %p115 = scmp.ne.s32.totalorder %s100, %s114
    %p116 = scmp.eq.s32.totalorder %s27, 0
    %p117 = por %p115, %p116
    %s119 = sadd.s32 %s118, 1
    %p122 = scmp.eq.s32.totalorder %s21, 1
    %p123 = scmp.ne.s32.totalorder %s118, %s120
    %p124 = scmp.eq.s32.totalorder %s21, 0
    %p125 = por %p123, %p124
    %p126 = scmp.ne.s32.totalorder %s118, %s120
    %p127 = scmp.eq.s32.totalorder %s26, 1
    %p128 = por %p126, %p127
    %p129 = scmp.ne.s32.totalorder %s120, %s121
    %p130 = scmp.eq.s32.totalorder %s26, 0
    %p131 = por %p129, %p130
    %p132 = scmp.ne.s32.totalorder %s120, %s121
    %p133 = scmp.eq.s32.totalorder %s27, 1
    %p134 = por %p132, %p133
    %p136 = scmp.ne.s32.totalorder %s121, %s135
    %p137 = scmp.eq.s32.totalorder %s27, 0
    %p138 = por %p136, %p137
    %s140 = sadd.s32 %s139, 1
    %p143 = scmp.eq.s32.totalorder %s21, 1
    %p144 = scmp.ne.s32.totalorder %s139, %s141
    %p145 = scmp.eq.s32.totalorder %s21, 0
    %p146 = por %p144, %p145
    %p147 = scmp.ne.s32.totalorder %s139, %s141
    %p148 = scmp.eq.s32.totalorder %s26, 1
    %p149 = por %p147, %p148
    %p150 = scmp.ne.s32.totalorder %s141, %s142
    %p151 = scmp.eq.s32.totalorder %s26, 0
    %p152 = por %p150, %p151
    %p153 = scmp.ne.s32.totalorder %s141, %s142
    %p154 = scmp.eq.s32.totalorder %s27, 1
    %p155 = por %p153, %p154
    %p157 = scmp.ne.s32.totalorder %s142, %s156
    %p158 = scmp.eq.s32.totalorder %s27, 0
    %p159 = por %p157, %p158
    %s161 = sadd.s32 %s160, 1
    %p164 = scmp.eq.s32.totalorder %s21, 1
    %p165 = scmp.ne.s32.totalorder %s160, %s162
    %p166 = scmp.eq.s32.totalorder %s21, 0
    %p167 = por %p165, %p166
    %p168 = scmp.ne.s32.totalorder %s160, %s162
    %p169 = scmp.eq.s32.totalorder %s26, 1
    %p170 = por %p168, %p169
    %p171 = scmp.ne.s32.totalorder %s162, %s163
    %p172 = scmp.eq.s32.totalorder %s26, 0
    %p173 = por %p171, %p172
    %p174 = scmp.ne.s32.totalorder %s162, %s163
    %p175 = scmp.eq.s32.totalorder %s27, 1
    %p176 = por %p174, %p175
    %p178 = scmp.ne.s32.totalorder %s163, %s177
    %p179 = scmp.eq.s32.totalorder %s27, 0
    %p180 = por %p178, %p179
    %s182 = sadd.s32 %s181, 1
    %p185 = scmp.eq.s32.totalorder %s21, 1
    %p186 = scmp.ne.s32.totalorder %s181, %s183
    %p187 = scmp.eq.s32.totalorder %s21, 0
    %p188 = por %p186, %p187
    %p189 = scmp.ne.s32.totalorder %s181, %s183
    %p190 = scmp.eq.s32.totalorder %s26, 1
    %p191 = por %p189, %p190
    %p192 = scmp.ne.s32.totalorder %s183, %s184
    %p193 = scmp.eq.s32.totalorder %s26, 0
    %p194 = por %p192, %p193
    %p195 = scmp.ne.s32.totalorder %s183, %s184
    %p196 = scmp.eq.s32.totalorder %s27, 1
    %p197 = por %p195, %p196
    %p199 = scmp.ne.s32.totalorder %s184, %s198
    %p200 = scmp.eq.s32.totalorder %s27, 0
    %p201 = por %p199, %p200
    %s203 = sadd.s32 %s202, 1
    %p206 = scmp.eq.s32.totalorder %s21, 1
    %p207 = scmp.ne.s32.totalorder %s202, %s204
    %p208 = scmp.eq.s32.totalorder %s21, 0
    %p209 = por %p207, %p208
    %p210 = scmp.ne.s32.totalorder %s202, %s204
    %p211 = scmp.eq.s32.totalorder %s26, 1
    %p212 = por %p210, %p211
    %p213 = scmp.ne.s32.totalorder %s204, %s205
    %p214 = scmp.eq.s32.totalorder %s26, 0
    %p215 = por %p213, %p214
    %p216 = scmp.ne.s32.totalorder %s204, %s205
    %p217 = scmp.eq.s32.totalorder %s27, 1
    %p218 = por %p216, %p217
    %p220 = scmp.ne.s32.totalorder %s205, %s219
    %p221 = scmp.eq.s32.totalorder %s27, 0
    %p222 = por %p220, %p221
    %s224 = sadd.s32 %s223, 1
    %p227 = scmp.eq.s32.totalorder %s21, 1
    %p228 = scmp.ne.s32.totalorder %s223, %s225
    %p229 = scmp.eq.s32.totalorder %s21, 0
    %p230 = por %p228, %p229
    %p231 = scmp.ne.s32.totalorder %s223, %s225
    %p232 = scmp.eq.s32.totalorder %s26, 1
    %p233 = por %p231, %p232
    %p234 = scmp.ne.s32.totalorder %s225, %s226
    %p235 = scmp.eq.s32.totalorder %s26, 0
    %p236 = por %p234, %p235
    %p237 = scmp.ne.s32.totalorder %s225, %s226
    %p238 = scmp.eq.s32.totalorder %s27, 1
    %p239 = por %p237, %p238
    %p241 = scmp.ne.s32.totalorder %s226, %s240
    %p242 = scmp.eq.s32.totalorder %s27, 0
    %p243 = por %p241, %p242
    %s245 = sadd.s32 %s244, 1
    %p248 = scmp.eq.s32.totalorder %s21, 1
    %p249 = scmp.ne.s32.totalorder %s244, %s246
    %p250 = scmp.eq.s32.totalorder %s21, 0
    %p251 = por %p249, %p250
    %p252 = scmp.ne.s32.totalorder %s244, %s246
    %p253 = scmp.eq.s32.totalorder %s26, 1
    %p254 = por %p252, %p253
    %p255 = scmp.ne.s32.totalorder %s246, %s247
    %p256 = scmp.eq.s32.totalorder %s26, 0
    %p257 = por %p255, %p256
    %p258 = scmp.ne.s32.totalorder %s246, %s247
    %p259 = scmp.eq.s32.totalorder %s27, 1
    %p260 = por %p258, %p259
    %p262 = scmp.ne.s32.totalorder %s247, %s261
    %p263 = scmp.eq.s32.totalorder %s27, 0
    %p264 = por %p262, %p263
    %s266 = sadd.s32 %s265, 1
    %p269 = scmp.eq.s32.totalorder %s21, 1
    %p270 = scmp.ne.s32.totalorder %s265, %s267
    %p271 = scmp.eq.s32.totalorder %s21, 0
    %p272 = por %p270, %p271
    %p273 = scmp.ne.s32.totalorder %s265, %s267
    %p274 = scmp.eq.s32.totalorder %s26, 1
    %p275 = por %p273, %p274
    %p276 = scmp.ne.s32.totalorder %s267, %s268
    %p277 = scmp.eq.s32.totalorder %s26, 0
    %p278 = por %p276, %p277
    %p279 = scmp.ne.s32.totalorder %s267, %s268
    %p280 = scmp.eq.s32.totalorder %s27, 1
    %p281 = por %p279, %p280
    %p283 = scmp.ne.s32.totalorder %s268, %s282
    %p284 = scmp.eq.s32.totalorder %s27, 0
    %p285 = por %p283, %p284
    %s287 = sadd.s32 %s286, 1
    %p290 = scmp.eq.s32.totalorder %s21, 1
    %p291 = scmp.ne.s32.totalorder %s286, %s288
    %p292 = scmp.eq.s32.totalorder %s21, 0
    %p293 = por %p291, %p292
    %p294 = scmp.ne.s32.totalorder %s286, %s288
    %p295 = scmp.eq.s32.totalorder %s26, 1
    %p296 = por %p294, %p295
    %p297 = scmp.ne.s32.totalorder %s288, %s289
    %p298 = scmp.eq.s32.totalorder %s26, 0
    %p299 = por %p297, %p298
    %p300 = scmp.ne.s32.totalorder %s288, %s289
    %p301 = scmp.eq.s32.totalorder %s27, 1
    %p302 = por %p300, %p301
    %p304 = scmp.ne.s32.totalorder %s289, %s303
    %p305 = scmp.eq.s32.totalorder %s27, 0
    %p306 = por %p304, %p305
    %s308 = sadd.s32 %s307, 1
    %p311 = scmp.eq.s32.totalorder %s21, 1
    %p312 = scmp.ne.s32.totalorder %s307, %s309
    %p313 = scmp.eq.s32.totalorder %s21, 0
    %p314 = por %p312, %p313
    %p315 = scmp.ne.s32.totalorder %s307, %s309
    %p316 = scmp.eq.s32.totalorder %s26, 1
    %p317 = por %p315, %p316
    %p318 = scmp.ne.s32.totalorder %s309, %s310
    %p319 = scmp.eq.s32.totalorder %s26, 0
    %p320 = por %p318, %p319
    %p321 = scmp.ne.s32.totalorder %s309, %s310
    %p322 = scmp.eq.s32.totalorder %s27, 1
    %p323 = por %p321, %p322
    %p325 = scmp.ne.s32.totalorder %s310, %s324
    %p326 = scmp.eq.s32.totalorder %s27, 0
    %p327 = por %p325, %p326
    %s329 = sadd.s32 %s328, 1
    %p332 = scmp.eq.s32.totalorder %s21, 1
    %p333 = scmp.ne.s32.totalorder %s328, %s330
    %p334 = scmp.eq.s32.totalorder %s21, 0
    %p335 = por %p333, %p334
    %p336 = scmp.ne.s32.totalorder %s328, %s330
    %p337 = scmp.eq.s32.totalorder %s26, 1
    %p338 = por %p336, %p337
    %p339 = scmp.ne.s32.totalorder %s330, %s331
    %p340 = scmp.eq.s32.totalorder %s26, 0
    %p341 = por %p339, %p340
    %p342 = scmp.ne.s32.totalorder %s330, %s331
    %p343 = scmp.eq.s32.totalorder %s27, 1
    %p344 = por %p342, %p343
    %p346 = scmp.ne.s32.totalorder %s331, %s345
    %p347 = scmp.eq.s32.totalorder %s27, 0
    %p348 = por %p346, %p347
    %s349 = ssub.s32 %s21, %s28
    %p350 = scmp.eq.s32.totalorder %s349, 0
    %s352 = sadd.s32 %s351, 1
    %s353 = scalar_select %p350, %s351, %s352
    %p356 = pneg %p350
    %p357 = scmp.eq.s32.totalorder %s21, 1
    %p358 = por %p356, %p357
    %p359 = scmp.ne.s32.totalorder %s351, %s354
    %p360 = scmp.eq.s32.totalorder %s21, 0
    %p361 = por %p359, %p360
    %p362 = scmp.ne.s32.totalorder %s351, %s354
    %p363 = scmp.eq.s32.totalorder %s26, 1
    %p364 = por %p362, %p363
    %p365 = scmp.ne.s32.totalorder %s354, %s355
    %p366 = scmp.eq.s32.totalorder %s26, 0
    %p367 = por %p365, %p366
    %p368 = scmp.ne.s32.totalorder %s354, %s355
    %p369 = scmp.eq.s32.totalorder %s27, 1
    %p370 = por %p368, %p369
    %p372 = scmp.ne.s32.totalorder %s355, %s371
    %p373 = scmp.eq.s32.totalorder %s27, 0
    %p374 = por %p372, %p373
    %p375 = scmp.le.s32.totalorder 1, %s21
    %p376 = scmp.lt.s32.totalorder %s21, 3
    %p377 = pnand %p375, %p376
    %p378 = pneg %p377
    // Predicated region
    $region9: #{context_encoder.2} parent=5 // pred_check
      _
    $region10: #{context_encoder.2} parent=5 // pred_check_branch
      %380 = sbr.rel (%p377) target = $region12
    $region11: #{context_encoder.2} parent=5 // pred_region
      %s381 = ssub.s32 %s21, 1
      // Predicated region
      $region13: #{context_encoder.2} parent=11 // pred_check
        %p382 = pneg %p68
      $region14: #{context_encoder.2} parent=11 // pred_check_branch
        %384 = sbr.rel (%p382) target = $region16
      $region15: #{context_encoder.2} parent=11 // pred_region
        _
      $region16: #{context_encoder.2} parent=11 // pred_fallthru
        _
      // Predicated region
      $region17: #{context_encoder.2} parent=11 // pred_check
        %p385 = pneg %p89
      $region18: #{context_encoder.2} parent=11 // pred_check_branch
        %387 = sbr.rel (%p385) target = $region20
      $region19: #{context_encoder.2} parent=11 // pred_region
        _
      $region20: #{context_encoder.2} parent=11 // pred_fallthru
        _
      // Predicated region
      $region21: #{context_encoder.2} parent=11 // pred_check
        %p388 = pneg %p110
      $region22: #{context_encoder.2} parent=11 // pred_check_branch
        %390 = sbr.rel (%p388) target = $region24
      $region23: #{context_encoder.2} parent=11 // pred_region
        _
      $region24: #{context_encoder.2} parent=11 // pred_fallthru
        _
      // Predicated region
      $region25: #{context_encoder.2} parent=11 // pred_check
        %p391 = pneg %p131
      $region26: #{context_encoder.2} parent=11 // pred_check_branch
        %393 = sbr.rel (%p391) target = $region28
      $region27: #{context_encoder.2} parent=11 // pred_region
        _
      $region28: #{context_encoder.2} parent=11 // pred_fallthru
        _
      // Predicated region
      $region29: #{context_encoder.2} parent=11 // pred_check
        %p394 = pneg %p152
      $region30: #{context_encoder.2} parent=11 // pred_check_branch
        %396 = sbr.rel (%p394) target = $region32
      $region31: #{context_encoder.2} parent=11 // pred_region
        _
      $region32: #{context_encoder.2} parent=11 // pred_fallthru
        _
      // Predicated region
      $region33: #{context_encoder.2} parent=11 // pred_check
        %p397 = pneg %p173
      $region34: #{context_encoder.2} parent=11 // pred_check_branch
        %399 = sbr.rel (%p397) target = $region36
      $region35: #{context_encoder.2} parent=11 // pred_region
        _
      $region36: #{context_encoder.2} parent=11 // pred_fallthru
        _
      // Predicated region
      $region37: #{context_encoder.2} parent=11 // pred_check
        %p400 = pneg %p194
      $region38: #{context_encoder.2} parent=11 // pred_check_branch
        %402 = sbr.rel (%p400) target = $region40
      $region39: #{context_encoder.2} parent=11 // pred_region
        _
      $region40: #{context_encoder.2} parent=11 // pred_fallthru
        _
      // Predicated region
      $region41: #{context_encoder.2} parent=11 // pred_check
        %p403 = pneg %p215
      $region42: #{context_encoder.2} parent=11 // pred_check_branch
        %405 = sbr.rel (%p403) target = $region44
      $region43: #{context_encoder.2} parent=11 // pred_region
        _
      $region44: #{context_encoder.2} parent=11 // pred_fallthru
        _
      // Predicated region
      $region45: #{context_encoder.2} parent=11 // pred_check
        %p406 = pneg %p236
      $region46: #{context_encoder.2} parent=11 // pred_check_branch
        %408 = sbr.rel (%p406) target = $region48
      $region47: #{context_encoder.2} parent=11 // pred_region
        _
      $region48: #{context_encoder.2} parent=11 // pred_fallthru
        _
      // Predicated region
      $region49: #{context_encoder.2} parent=11 // pred_check
        %p409 = pneg %p257
      $region50: #{context_encoder.2} parent=11 // pred_check_branch
        %411 = sbr.rel (%p409) target = $region52
      $region51: #{context_encoder.2} parent=11 // pred_region
        _
      $region52: #{context_encoder.2} parent=11 // pred_fallthru
        _
      // Predicated region
      $region53: #{context_encoder.2} parent=11 // pred_check
        %p412 = pneg %p278
      $region54: #{context_encoder.2} parent=11 // pred_check_branch
        %414 = sbr.rel (%p412) target = $region56
      $region55: #{context_encoder.2} parent=11 // pred_region
        _
      $region56: #{context_encoder.2} parent=11 // pred_fallthru
        _
      // Predicated region
      $region57: #{context_encoder.2} parent=11 // pred_check
        %p415 = pneg %p299
      $region58: #{context_encoder.2} parent=11 // pred_check_branch
        %417 = sbr.rel (%p415) target = $region60
      $region59: #{context_encoder.2} parent=11 // pred_region
        _
      $region60: #{context_encoder.2} parent=11 // pred_fallthru
        _
      // Predicated region
      $region61: #{context_encoder.2} parent=11 // pred_check
        %p418 = pneg %p320
      $region62: #{context_encoder.2} parent=11 // pred_check_branch
        %420 = sbr.rel (%p418) target = $region64
      $region63: #{context_encoder.2} parent=11 // pred_region
        _
      $region64: #{context_encoder.2} parent=11 // pred_fallthru
        _
      // Predicated region
      $region65: #{context_encoder.2} parent=11 // pred_check
        %p421 = pneg %p341
      $region66: #{context_encoder.2} parent=11 // pred_check_branch
        %423 = sbr.rel (%p421) target = $region68
      $region67: #{context_encoder.2} parent=11 // pred_region
        _
      $region68: #{context_encoder.2} parent=11 // pred_fallthru
        _
    $region12: #{context_encoder.2} parent=5 // pred_fallthru
      _
    %p424 = scmp.lt.s32.totalorder %s21, 2
    // Predicated region
    $region69: #{context_encoder.2} parent=5 // pred_check
      %p425 = pneg %p424
    $region70: #{context_encoder.2} parent=5 // pred_check_branch
      %427 = sbr.rel (%p425) target = $region72
    $region71: #{context_encoder.2} parent=5 // pred_region
      // Predicated region
      $region73: #{context_encoder.2} parent=71 // pred_check
        %p428 = pneg %p41
      $region74: #{context_encoder.2} parent=71 // pred_check_branch
        %430 = sbr.rel (%p428) target = $region76
      $region75: #{context_encoder.2} parent=71 // pred_region
        %p431 = scmp.lt.s32.totalorder %s21, 1
        %s432 = scalar_select %p431, %s21, 1
        %s433 = smul.addr %s432, 8
        %s434 = scalar_lea.vmem %s0, %s433
      $region76: #{context_encoder.2} parent=71 // pred_fallthru
        _
    $region72: #{context_encoder.2} parent=5 // pred_fallthru
      _
    %p435 = scmp.le.s32.totalorder 1, %s21
    %p436 = scmp.lt.s32.totalorder %s21, 3
    %p437 = pnand %p435, %p436
    %p438 = pneg %p437
    // Predicated region
    $region77: #{context_encoder.2} parent=5 // pred_check
      _
    $region78: #{context_encoder.2} parent=5 // pred_check_branch
      %440 = sbr.rel (%p437) target = $region80
    $region79: #{context_encoder.2} parent=5 // pred_region
      %s441 = ssub.s32 %s21, 1
      %p442 = scmp.lt.s32.totalorder %s26, 1
      %s443 = scalar_select %p442, %s26, 1
      %s444 = smul.addr %s443, 8
      %s445 = scalar_lea.vmem %s0, %s444
      %p446 = pneg %p47
      %p447 = pneg %p44
      %p448 = pneg %p68
      %p449 = pneg %p65
      %p450 = pneg %p89
      %p451 = pneg %p86
      %p452 = pneg %p110
      %p453 = pneg %p107
      %p454 = pneg %p131
      %p455 = pneg %p128
      %p456 = pneg %p152
      %p457 = pneg %p149
      %p458 = pneg %p173
      %p459 = pneg %p170
      %p460 = pneg %p194
      %p461 = pneg %p191
      %p462 = pneg %p215
      %p463 = pneg %p212
      %p464 = pneg %p236
      %p465 = pneg %p233
      %p466 = pneg %p257
      %p467 = pneg %p254
      %p468 = pneg %p278
      %p469 = pneg %p275
      %p470 = pneg %p299
      %p471 = pneg %p296
      %p472 = pneg %p320
      %p473 = pneg %p317
      %p474 = pneg %p341
      %p475 = pneg %p338
      %p476 = pneg %p367
      %p477 = pneg %p364
      %p478 = scmp.lt.s32.totalorder %s26, 1
      %s479 = scalar_select %p478, %s26, 1
      %s480 = smul.addr %s479, 8
      %s481 = scalar_lea.vmem %s15, %s480
      %p482 = scmp.lt.s32.totalorder %s26, 1
      %s483 = scalar_select %p482, %s26, 1
      %s484 = smul.addr %s483, 8
      %s485 = scalar_lea.vmem %s0, %s484
      %p486 = scmp.lt.s32.totalorder %s26, 1
      %s487 = scalar_select %p486, %s26, 1
      %s488 = smul.addr %s487, 8
      %s489 = scalar_lea.vmem %s15, %s488
      %v490 = vld [vmem:[%s485] sm:$0xff]
      %v491 = vld [vmem:[%s1] sm:$0xff]
      %v492 = vld [vmem:[%s1 + $0x8] sm:$0xff]
      %v493 = vld [vmem:[%s1 + $0x10] sm:$0xff]
      %v494 = vld [vmem:[%s1 + $0x18] sm:$0xff]
      %v495 = vld [vmem:[%s2] sm:$0x1]
      %v497 = vperm.slane %v495, 0
      %vm499 = vcmask 261120
      %v501 = vsel %vm499, %v490, 0
      %503 = vmatpush.msra.mxu0 0.0
      %504 = vmatpush.msra.mxu0 0.0
      %505 = vmatpush.msra.mxu0 0.0
      %506 = vmatpush.msra.mxu0 0.0
      %507 = vmatpush.msra.mxu0 0.0
      %508 = vmatpush.msra.mxu0 0.0
      %509 = vmatpush.msra.mxu0 0.0
      %510 = vmatpush.msra.mxu0 0.0
      %511 = vmatpush.msra.mxu0 0.0
      %512 = vmatpush.msra.mxu0 0.0
      %513 = vmatpush.msra.mxu0 0.0
      %514 = vmatpush.msra.mxu0 0.0
      %515 = vmatpush.msra.mxu0 %v494
      %516 = vmatpush.msra.mxu0 %v493
      %517 = vmatpush.msra.mxu0 %v492
      %518 = vmatpush.msra.mxu0 %v491
      %519 = vmatmul.f32.gmra.mxu0 %v501
      %v520 = vpop.f32.mrf.mxu0
      %v521 = vadd.f32 %v497, %v520
      %522 = vdwg.mxu0
      %v523 = vmax.f32 %v521, 0.0
      %v524 = vld [vmem:[%s3] sm:$0xff]
      %v525 = vld [vmem:[%s3 + $0x8] sm:$0xff]
      %v526 = vld [vmem:[%s4] sm:$0x1]
      %v528 = vperm.slane %v526, 0
      %vm530 = vcmask 130048
      %v532 = vsel %vm530, %v523, 0
      %534 = vmatpush.msra.mxu0 0.0
      %535 = vmatpush.msra.mxu0 0.0
      %536 = vmatpush.msra.mxu0 0.0
      %537 = vmatpush.msra.mxu0 0.0
      %538 = vmatpush.msra.mxu0 0.0
      %539 = vmatpush.msra.mxu0 0.0
      %540 = vmatpush.msra.mxu0 0.0
      %541 = vmatpush.msra.mxu0 0.0
      %542 = vmatpush.msra.mxu0 0.0
      %543 = vmatpush.msra.mxu0 0.0
      %544 = vmatpush.msra.mxu0 0.0
      %545 = vmatpush.msra.mxu0 0.0
      %546 = vmatpush.msra.mxu0 0.0
      %547 = vmatpush.msra.mxu0 0.0
      %548 = vmatpush.msra.mxu0 %v525
      %549 = vmatpush.msra.mxu0 %v524
      %550 = vmatmul.f32.gmra.mxu0 %v532
      %v551 = vpop.f32.mrf.mxu0
      %v552 = vadd.f32 %v528, %v551
      %553 = vdwg.mxu0
      %v554 = vmax.f32 %v552, 0.0
      %555 = vst.msk [vmem:[#allocation2] sm:$0xff] %vm530, 0.0
      %556 = vst.msk [vmem:[#allocation2 + $0x10] sm:$0xff] %vm530, 0.0
      %557 = vst.msk [vmem:[#allocation2 + $0x8] sm:$0xff] %vm530, %v554
      %v558 = vld [vmem:[#allocation2] sm:$0xff]
      %559 = vst.msk [vmem:[#allocation3] sm:$0xff] %vm530, %v558
      %v560 = vld [vmem:[#allocation2 + $0x1] sm:$0xff]
      %562 = vrot.lane.b32.xlu0 %v560, 16
      %v563 = vpop.permute.xlu0 %562
      %vm565 = vcmask 261248
      %566 = vst.msk [vmem:[#allocation3] sm:$0xff] %vm565, %v563
      %v567 = vld [vmem:[#allocation2 + $0x2] sm:$0xff]
      %569 = vrot.lane.b32.xlu0 %v567, 32
      %v570 = vpop.permute.xlu0 %569
      %vm572 = vcmask 392448
      %573 = vst.msk [vmem:[#allocation3] sm:$0xff] %vm572, %v570
      %v574 = vld [vmem:[#allocation2 + $0x3] sm:$0xff]
      %576 = vrot.lane.b32.xlu0 %v574, 48
      %v577 = vpop.permute.xlu0 %576
      %vm579 = vcmask 523648
      %580 = vst.msk [vmem:[#allocation3] sm:$0xff] %vm579, %v577
      %v581 = vld [vmem:[#allocation2 + $0x4] sm:$0xff]
      %583 = vrot.lane.b32.xlu0 %v581, 64
      %v584 = vpop.permute.xlu0 %583
      %vm586 = vcmask 654848
      %587 = vst.msk [vmem:[#allocation3] sm:$0xff] %vm586, %v584
      %v588 = vld [vmem:[#allocation2 + $0x5] sm:$0xff]
      %590 = vrot.lane.b32.xlu0 %v588, 80
      %v591 = vpop.permute.xlu0 %590
      %vm593 = vcmask 786048
      %594 = vst.msk [vmem:[#allocation3] sm:$0xff] %vm593, %v591
      %v595 = vld [vmem:[#allocation2 + $0x6] sm:$0xff]
      %597 = vrot.lane.b32.xlu0 %v595, 96
      %v598 = vpop.permute.xlu0 %597
      %vm600 = vcmask 917248
      %601 = vst.msk [vmem:[#allocation3] sm:$0xff] %vm600, %v598
      %v602 = vld [vmem:[#allocation2 + $0x7] sm:$0xff]
      %604 = vrot.lane.b32.xlu0 %v602, 112
      %v605 = vpop.permute.xlu0 %604
      %vm607 = vcmask 1048448
      %608 = vst.msk [vmem:[#allocation3] sm:$0xff] %vm607, %v605
      %v609 = vld [vmem:[#allocation2 + $0x8] sm:$0xff]
      %610 = vst.msk [vmem:[#allocation3 + $0x8] sm:$0xff] %vm530, %v609
      %v611 = vld [vmem:[#allocation2 + $0x9] sm:$0xff]
      %613 = vrot.lane.b32.xlu0 %v611, 16
      %v614 = vpop.permute.xlu0 %613
      %616 = vst.msk [vmem:[#allocation3 + $0x8] sm:$0xff] %vm565, %v614
      %v617 = vld [vmem:[#allocation2 + $0xa] sm:$0xff]
      %619 = vrot.lane.b32.xlu0 %v617, 32
      %v620 = vpop.permute.xlu0 %619
      %622 = vst.msk [vmem:[#allocation3 + $0x8] sm:$0xff] %vm572, %v620
      %v623 = vld [vmem:[#allocation2 + $0xb] sm:$0xff]
      %625 = vrot.lane.b32.xlu0 %v623, 48
      %v626 = vpop.permute.xlu0 %625
      %628 = vst.msk [vmem:[#allocation3 + $0x8] sm:$0xff] %vm579, %v626
      %v629 = vld [vmem:[#allocation2 + $0xc] sm:$0xff]
      %631 = vrot.lane.b32.xlu0 %v629, 64
      %v632 = vpop.permute.xlu0 %631
      %634 = vst.msk [vmem:[#allocation3 + $0x8] sm:$0xff] %vm586, %v632
      %v635 = vld [vmem:[#allocation2 + $0xd] sm:$0xff]
      %637 = vrot.lane.b32.xlu0 %v635, 80
      %v638 = vpop.permute.xlu0 %637
      %640 = vst.msk [vmem:[#allocation3 + $0x8] sm:$0xff] %vm593, %v638
      %v641 = vld [vmem:[#allocation2 + $0xe] sm:$0xff]
      %643 = vrot.lane.b32.xlu0 %v641, 96
      %v644 = vpop.permute.xlu0 %643
      %646 = vst.msk [vmem:[#allocation3 + $0x8] sm:$0xff] %vm600, %v644
      %v647 = vld [vmem:[#allocation2 + $0xf] sm:$0xff]
      %649 = vrot.lane.b32.xlu0 %v647, 112
      %v650 = vpop.permute.xlu0 %649
      %652 = vst.msk [vmem:[#allocation3 + $0x8] sm:$0xff] %vm607, %v650
      %v653 = vld [vmem:[#allocation3] sm:$0xff]
      %v654 = vld [vmem:[#allocation3 + $0x8] sm:$0xff]
      %v655 = vld [vmem:[%s5] sm:$0xff]
      %v656 = vld [vmem:[%s5 + $0x8] sm:$0xff]
      %v657 = vld [vmem:[%s5 + $0x10] sm:$0xff]
      %v658 = vld [vmem:[%s5 + $0x18] sm:$0xff]
      %v659 = vld [vmem:[%s5 + $0x20] sm:$0xff]
      %v660 = vld [vmem:[%s5 + $0x28] sm:$0xff]
      %v661 = vld [vmem:[%s5 + $0x30] sm:$0xff]
      %v662 = vld [vmem:[%s5 + $0x38] sm:$0xff]
      %v663 = vld [vmem:[%s5 + $0x40] sm:$0xff]
      %v664 = vld [vmem:[%s5 + $0x48] sm:$0xff]
      %v665 = vld [vmem:[%s5 + $0x50] sm:$0xff]
      %v666 = vld [vmem:[%s5 + $0x58] sm:$0xff]
      %v667 = vld [vmem:[%s5 + $0x60] sm:$0xff]
      %v668 = vld [vmem:[%s5 + $0x68] sm:$0xff]
      %v669 = vld [vmem:[%s5 + $0x70] sm:$0xff]
      %v670 = vld [vmem:[%s5 + $0x78] sm:$0xff]
      %v671 = vld [vmem:[%s5 + $0x80] sm:$0xff]
      %v672 = vld [vmem:[%s5 + $0x88] sm:$0xff]
      %v673 = vld [vmem:[%s5 + $0x90] sm:$0xff]
      %v674 = vld [vmem:[%s5 + $0x98] sm:$0xff]
      %v675 = vld [vmem:[%s5 + $0xa0] sm:$0xff]
      %v676 = vld [vmem:[%s5 + $0xa8] sm:$0xff]
      %v677 = vld [vmem:[%s5 + $0xb0] sm:$0xff]
      %v678 = vld [vmem:[%s5 + $0xb8] sm:$0xff]
      %v679 = vld [vmem:[%s5 + $0xc0] sm:$0xff]
      %v680 = vld [vmem:[%s5 + $0xc8] sm:$0xff]
      %v681 = vld [vmem:[%s5 + $0xd0] sm:$0xff]
      %v682 = vld [vmem:[%s5 + $0xd8] sm:$0xff]
      %v683 = vld [vmem:[%s5 + $0xe0] sm:$0xff]
      %v684 = vld [vmem:[%s5 + $0xe8] sm:$0xff]
      %v685 = vld [vmem:[%s5 + $0xf0] sm:$0xff]
      %v686 = vld [vmem:[%s5 + $0xf8] sm:$0xff]
      %v687 = vld [vmem:[%s5 + $0x100] sm:$0xff]
      %v688 = vld [vmem:[%s5 + $0x108] sm:$0xff]
      %v689 = vld [vmem:[%s5 + $0x110] sm:$0xff]
      %v690 = vld [vmem:[%s5 + $0x118] sm:$0xff]
      %v691 = vld [vmem:[%s5 + $0x120] sm:$0xff]
      %v692 = vld [vmem:[%s5 + $0x128] sm:$0xff]
      %v693 = vld [vmem:[%s5 + $0x130] sm:$0xff]
      %v694 = vld [vmem:[%s5 + $0x138] sm:$0xff]
      %v695 = vld [vmem:[%s5 + $0x140] sm:$0xff]
      %v696 = vld [vmem:[%s5 + $0x148] sm:$0xff]
      %v697 = vld [vmem:[%s5 + $0x150] sm:$0xff]
      %v698 = vld [vmem:[%s5 + $0x158] sm:$0xff]
      %v699 = vld [vmem:[%s5 + $0x160] sm:$0xff]
      %v700 = vld [vmem:[%s5 + $0x168] sm:$0xff]
      %v701 = vld [vmem:[%s5 + $0x170] sm:$0xff]
      %v702 = vld [vmem:[%s5 + $0x178] sm:$0xff]
      %v703 = vld [vmem:[%s5 + $0x180] sm:$0xff]
      %v704 = vld [vmem:[%s5 + $0x188] sm:$0xff]
      %v705 = vld [vmem:[%s5 + $0x190] sm:$0xff]
      %v706 = vld [vmem:[%s5 + $0x198] sm:$0xff]
      %v707 = vld [vmem:[%s5 + $0x1a0] sm:$0xff]
      %v708 = vld [vmem:[%s5 + $0x1a8] sm:$0xff]
      %v709 = vld [vmem:[%s5 + $0x1b0] sm:$0xff]
      %v710 = vld [vmem:[%s5 + $0x1b8] sm:$0xff]
      %v711 = vld [vmem:[%s5 + $0x1c0] sm:$0xff]
      %v712 = vld [vmem:[%s5 + $0x1c8] sm:$0xff]
      %v713 = vld [vmem:[%s5 + $0x1d0] sm:$0xff]
      %v714 = vld [vmem:[%s5 + $0x1d8] sm:$0xff]
      %v715 = vld [vmem:[%s5 + $0x1e0] sm:$0xff]
      %v716 = vld [vmem:[%s5 + $0x1e8] sm:$0xff]
      %v717 = vld [vmem:[%s5 + $0x1f0] sm:$0xff]
      %v718 = vld [vmem:[%s5 + $0x1f8] sm:$0xff]
      %v719 = vld [vmem:[%s6] sm:$0x3]
      %v721 = vperm.slane %v719, 0
      %v722 = vperm.slane %v719, 1
      %725 = vmatpush.msra.mxu0 %v685
      %726 = vmatpush.msra.mxu0 %v683
      %727 = vmatpush.msra.mxu0 %v681
      %728 = vmatpush.msra.mxu0 %v679
      %729 = vmatpush.msra.mxu0 %v677
      %730 = vmatpush.msra.mxu0 %v675
      %731 = vmatpush.msra.mxu0 %v673
      %732 = vmatpush.msra.mxu0 %v671
      %733 = vmatpush.msra.mxu0 %v669
      %734 = vmatpush.msra.mxu0 %v667
      %735 = vmatpush.msra.mxu0 %v665
      %736 = vmatpush.msra.mxu0 %v663
      %737 = vmatpush.msra.mxu0 %v661
      %738 = vmatpush.msra.mxu0 %v659
      %739 = vmatpush.msra.mxu0 %v657
      %740 = vmatpush.msra.mxu0 %v655
      %741 = vmatmul.f32.gmra.mxu0 %v653
      %v742 = vpop.f32.mrf.mxu0
      %v743 = vadd.f32 %v721, %v742
      %744 = vdwg.mxu0
      %745 = vmatpush.msra.mxu0 %v717
      %746 = vmatpush.msra.mxu0 %v715
      %747 = vmatpush.msra.mxu0 %v713
      %748 = vmatpush.msra.mxu0 %v711
      %749 = vmatpush.msra.mxu0 %v709
      %750 = vmatpush.msra.mxu0 %v707
      %751 = vmatpush.msra.mxu0 %v705
      %752 = vmatpush.msra.mxu0 %v703
      %753 = vmatpush.msra.mxu0 %v701
      %754 = vmatpush.msra.mxu0 %v699
      %755 = vmatpush.msra.mxu0 %v697
      %756 = vmatpush.msra.mxu0 %v695
      %757 = vmatpush.msra.mxu0 %v693
      %758 = vmatpush.msra.mxu0 %v691
      %759 = vmatpush.msra.mxu0 %v689
      %760 = vmatpush.msra.mxu0 %v687
      %761 = vmatmul.f32.gmra.mxu0 %v654
      %v762 = vpop.f32.mrf.mxu0
      %v763 = vadd.f32 %v743, %v762
      %764 = vdwg.mxu0
      %765 = vmatpush.msra.mxu0 %v686
      %766 = vmatpush.msra.mxu0 %v684
      %767 = vmatpush.msra.mxu0 %v682
      %768 = vmatpush.msra.mxu0 %v680
      %769 = vmatpush.msra.mxu0 %v678
      %770 = vmatpush.msra.mxu0 %v676
      %771 = vmatpush.msra.mxu0 %v674
      %772 = vmatpush.msra.mxu0 %v672
      %773 = vmatpush.msra.mxu0 %v670
      %774 = vmatpush.msra.mxu0 %v668
      %775 = vmatpush.msra.mxu0 %v666
      %776 = vmatpush.msra.mxu0 %v664
      %777 = vmatpush.msra.mxu0 %v662
      %778 = vmatpush.msra.mxu0 %v660
      %779 = vmatpush.msra.mxu0 %v658
      %780 = vmatpush.msra.mxu0 %v656
      %781 = vmatmul.f32.gmra.mxu0 %v653
      %v782 = vpop.f32.mrf.mxu0
      %v783 = vadd.f32 %v722, %v782
      %784 = vdwg.mxu0
      %785 = vmatpush.msra.mxu0 %v718
      %786 = vmatpush.msra.mxu0 %v716
      %787 = vmatpush.msra.mxu0 %v714
      %788 = vmatpush.msra.mxu0 %v712
      %789 = vmatpush.msra.mxu0 %v710
      %790 = vmatpush.msra.mxu0 %v708
      %791 = vmatpush.msra.mxu0 %v706
      %792 = vmatpush.msra.mxu0 %v704
      %793 = vmatpush.msra.mxu0 %v702
      %794 = vmatpush.msra.mxu0 %v700
      %795 = vmatpush.msra.mxu0 %v698
      %796 = vmatpush.msra.mxu0 %v696
      %797 = vmatpush.msra.mxu0 %v694
      %798 = vmatpush.msra.mxu0 %v692
      %799 = vmatpush.msra.mxu0 %v690
      %800 = vmatpush.msra.mxu0 %v688
      %801 = vmatmul.f32.gmra.mxu0 %v654
      %v802 = vpop.f32.mrf.mxu0
      %v803 = vadd.f32 %v783, %v802
      %804 = vdwg.mxu0
      %v805 = vmax.f32 %v763, 0.0
      %v806 = vmax.f32 %v803, 0.0
      %v807 = vlaneseq
      %vm808 = vcmp.ge.s32.totalorder %v807, 0
      %vm809 = vcmp.lt.s32.totalorder %v807, 256
      %vm810 = vmand %vm808, %vm809
      %811 = vst.msk [vmem:[#allocation4] ss:$8 sm:$0x3] %vm810, 0.0
      %812 = vst.msk [vmem:[#allocation4] ss:$8 sm:$0x0] %vm810, 0.0
      %s813 = scalar_lea.vmem [#allocation4], 17
      %814 = vst.msk [vmem:[%s813] ss:$8 sm:$0x3] %vm810, 0.0
      %815 = vst.msk [vmem:[%s813] ss:$8 sm:$0x0] %vm810, 0.0
      %v818 = vrot.slane %v805, 7
      %v819 = vrot.slane %v806, 7
      %822 = vst [vmem:[#allocation4] sm:$0xfe] %v818
      %823 = vst [vmem:[#allocation4 + $0x8] sm:$0xfe] %v819
      %824 = vst [vmem:[#allocation4 + $0x10] sm:$0x1] %v818
      %825 = vst [vmem:[#allocation4 + $0x18] sm:$0x1] %v819
      %v826 = vld [vmem:[#allocation4] sm:$0xfe]
      %v827 = vld [vmem:[#allocation4 + $0x8] sm:$0xfe]
      %v828 = vld [vmem:[#allocation4 + $0x10] sm:$0x1]
      %v829 = vld [vmem:[#allocation4 + $0x18] sm:$0x1]
      %v830 = vld [vmem:[#allocation4] sm:$0xff]
      %v831 = vld [vmem:[#allocation4 + $0x8] sm:$0xff]
      %v834 = vrot.slane %v830, 7
      %v835 = vrot.slane %v831, 7
      %v838 = vmax.f32 %v826, %v834
      %v839 = vmax.f32 %v827, %v835
      %v840 = vmax.f32 %v828, %v834
      %v841 = vmax.f32 %v829, %v835
      %842 = vst [vmem:[#allocation4] sm:$0xfe] %v838
      %843 = vst [vmem:[#allocation4 + $0x8] sm:$0xfe] %v839
      %844 = vst [vmem:[#allocation4 + $0x10] sm:$0x1] %v840
      %845 = vst [vmem:[#allocation4 + $0x18] sm:$0x1] %v841
      %v846 = vld [vmem:[#allocation4] sm:$0xff]
      %v847 = vld [vmem:[#allocation4 + $0x8] sm:$0xff]
      %848 = vst [vmem:[#allocation5] sm:$0xff] %v846
      %849 = vst [vmem:[#allocation5 + $0x8] sm:$0xff] %v847
      %v850 = vld [vmem:[#allocation4] sm:$0xfe]
      %v851 = vld [vmem:[#allocation4 + $0x8] sm:$0xfe]
      %v852 = vld [vmem:[#allocation4 + $0x10] sm:$0x1]
      %v853 = vld [vmem:[#allocation4 + $0x18] sm:$0x1]
      %vm858 = vcmask 1046528
      %v859 = vrot.slane %v850, 1
      %v860 = vrot.slane %v852, 1
      %v861 = vsel %vm858, %v859, %v860
      %v862 = vrot.slane %v851, 1
      %v863 = vrot.slane %v853, 1
      %v864 = vsel %vm858, %v862, %v863
      %867 = vst [vmem:[#allocation5 + $0x10] sm:$0xff] %v861
      %868 = vst [vmem:[#allocation5 + $0x18] sm:$0xff] %v864
      %v869 = vld [vmem:[#allocation4] sm:$0xfc]
      %v870 = vld [vmem:[#allocation4 + $0x8] sm:$0xfc]
      %v871 = vld [vmem:[#allocation4 + $0x10] sm:$0x3]
      %v872 = vld [vmem:[#allocation4 + $0x18] sm:$0x3]
      %vm877 = vcmask 1045504
      %v878 = vrot.slane %v869, 2
      %v879 = vrot.slane %v871, 2
      %v880 = vsel %vm877, %v878, %v879
      %v881 = vrot.slane %v870, 2
      %v882 = vrot.slane %v872, 2
      %v883 = vsel %vm877, %v881, %v882
      %886 = vst [vmem:[#allocation5 + $0x20] sm:$0xff] %v880
      %887 = vst [vmem:[#allocation5 + $0x28] sm:$0xff] %v883
      %v888 = vld [vmem:[#allocation5] sm:$0xff]
      %v889 = vld [vmem:[#allocation5 + $0x8] sm:$0xff]
      %v890 = vld [vmem:[#allocation5 + $0x10] sm:$0xff]
      %v891 = vld [vmem:[#allocation5 + $0x18] sm:$0xff]
      %v892 = vld [vmem:[#allocation5 + $0x20] sm:$0xff]
      %v893 = vld [vmem:[#allocation5 + $0x28] sm:$0xff]
      %v894 = vld [vmem:[%s7] sm:$0xff]
      %v895 = vld [vmem:[%s7 + $0x8] sm:$0xff]
      %v896 = vld [vmem:[%s7 + $0x10] sm:$0xff]
      %v897 = vld [vmem:[%s7 + $0x18] sm:$0xff]
      %v898 = vld [vmem:[%s7 + $0x20] sm:$0xff]
      %v899 = vld [vmem:[%s7 + $0x28] sm:$0xff]
      %v900 = vld [vmem:[%s7 + $0x30] sm:$0xff]
      %v901 = vld [vmem:[%s7 + $0x38] sm:$0xff]
      %v902 = vld [vmem:[%s7 + $0x40] sm:$0xff]
      %v903 = vld [vmem:[%s7 + $0x48] sm:$0xff]
      %v904 = vld [vmem:[%s7 + $0x50] sm:$0xff]
      %v905 = vld [vmem:[%s7 + $0x58] sm:$0xff]
      %v906 = vld [vmem:[%s7 + $0x60] sm:$0xff]
      %v907 = vld [vmem:[%s7 + $0x68] sm:$0xff]
      %v908 = vld [vmem:[%s7 + $0x70] sm:$0xff]
      %v909 = vld [vmem:[%s7 + $0x78] sm:$0xff]
      %v910 = vld [vmem:[%s7 + $0x80] sm:$0xff]
      %v911 = vld [vmem:[%s7 + $0x88] sm:$0xff]
      %v912 = vld [vmem:[%s7 + $0x90] sm:$0xff]
      %v913 = vld [vmem:[%s7 + $0x98] sm:$0xff]
      %v914 = vld [vmem:[%s7 + $0xa0] sm:$0xff]
      %v915 = vld [vmem:[%s7 + $0xa8] sm:$0xff]
      %v916 = vld [vmem:[%s7 + $0xb0] sm:$0xff]
      %v917 = vld [vmem:[%s7 + $0xb8] sm:$0xff]
      %v918 = vld [vmem:[%s7 + $0xc0] sm:$0xff]
      %v919 = vld [vmem:[%s7 + $0xc8] sm:$0xff]
      %v920 = vld [vmem:[%s7 + $0xd0] sm:$0xff]
      %v921 = vld [vmem:[%s7 + $0xd8] sm:$0xff]
      %v922 = vld [vmem:[%s7 + $0xe0] sm:$0xff]
      %v923 = vld [vmem:[%s7 + $0xe8] sm:$0xff]
      %v924 = vld [vmem:[%s7 + $0xf0] sm:$0xff]
      %v925 = vld [vmem:[%s7 + $0xf8] sm:$0xff]
      %v926 = vld [vmem:[%s7 + $0x100] sm:$0xff]
      %v927 = vld [vmem:[%s7 + $0x108] sm:$0xff]
      %v928 = vld [vmem:[%s7 + $0x110] sm:$0xff]
      %v929 = vld [vmem:[%s7 + $0x118] sm:$0xff]
      %v930 = vld [vmem:[%s7 + $0x120] sm:$0xff]
      %v931 = vld [vmem:[%s7 + $0x128] sm:$0xff]
      %v932 = vld [vmem:[%s7 + $0x130] sm:$0xff]
      %v933 = vld [vmem:[%s7 + $0x138] sm:$0xff]
      %v934 = vld [vmem:[%s7 + $0x140] sm:$0xff]
      %v935 = vld [vmem:[%s7 + $0x148] sm:$0xff]
      %v936 = vld [vmem:[%s7 + $0x150] sm:$0xff]
      %v937 = vld [vmem:[%s7 + $0x158] sm:$0xff]
      %v938 = vld [vmem:[%s7 + $0x160] sm:$0xff]
      %v939 = vld [vmem:[%s7 + $0x168] sm:$0xff]
      %v940 = vld [vmem:[%s7 + $0x170] sm:$0xff]
      %v941 = vld [vmem:[%s7 + $0x178] sm:$0xff]
      %v942 = vld [vmem:[%s7 + $0x180] sm:$0xff]
      %v943 = vld [vmem:[%s7 + $0x188] sm:$0xff]
      %v944 = vld [vmem:[%s7 + $0x190] sm:$0xff]
      %v945 = vld [vmem:[%s7 + $0x198] sm:$0xff]
      %v946 = vld [vmem:[%s7 + $0x1a0] sm:$0xff]
      %v947 = vld [vmem:[%s7 + $0x1a8] sm:$0xff]
      %v948 = vld [vmem:[%s7 + $0x1b0] sm:$0xff]
      %v949 = vld [vmem:[%s7 + $0x1b8] sm:$0xff]
      %v950 = vld [vmem:[%s7 + $0x1c0] sm:$0xff]
      %v951 = vld [vmem:[%s7 + $0x1c8] sm:$0xff]
      %v952 = vld [vmem:[%s7 + $0x1d0] sm:$0xff]
      %v953 = vld [vmem:[%s7 + $0x1d8] sm:$0xff]
      %v954 = vld [vmem:[%s7 + $0x1e0] sm:$0xff]
      %v955 = vld [vmem:[%s7 + $0x1e8] sm:$0xff]
      %v956 = vld [vmem:[%s7 + $0x1f0] sm:$0xff]
      %v957 = vld [vmem:[%s7 + $0x1f8] sm:$0xff]
      %v958 = vld [vmem:[%s7 + $0x200] sm:$0xff]
      %v959 = vld [vmem:[%s7 + $0x208] sm:$0xff]
      %v960 = vld [vmem:[%s7 + $0x210] sm:$0xff]
      %v961 = vld [vmem:[%s7 + $0x218] sm:$0xff]
      %v962 = vld [vmem:[%s7 + $0x220] sm:$0xff]
      %v963 = vld [vmem:[%s7 + $0x228] sm:$0xff]
      %v964 = vld [vmem:[%s7 + $0x230] sm:$0xff]
      %v965 = vld [vmem:[%s7 + $0x238] sm:$0xff]
      %v966 = vld [vmem:[%s7 + $0x240] sm:$0xff]
      %v967 = vld [vmem:[%s7 + $0x248] sm:$0xff]
      %v968 = vld [vmem:[%s7 + $0x250] sm:$0xff]
      %v969 = vld [vmem:[%s7 + $0x258] sm:$0xff]
      %v970 = vld [vmem:[%s7 + $0x260] sm:$0xff]
      %v971 = vld [vmem:[%s7 + $0x268] sm:$0xff]
      %v972 = vld [vmem:[%s7 + $0x270] sm:$0xff]
      %v973 = vld [vmem:[%s7 + $0x278] sm:$0xff]
      %v974 = vld [vmem:[%s7 + $0x280] sm:$0xff]
      %v975 = vld [vmem:[%s7 + $0x288] sm:$0xff]
      %v976 = vld [vmem:[%s7 + $0x290] sm:$0xff]
      %v977 = vld [vmem:[%s7 + $0x298] sm:$0xff]
      %v978 = vld [vmem:[%s7 + $0x2a0] sm:$0xff]
      %v979 = vld [vmem:[%s7 + $0x2a8] sm:$0xff]
      %v980 = vld [vmem:[%s7 + $0x2b0] sm:$0xff]
      %v981 = vld [vmem:[%s7 + $0x2b8] sm:$0xff]
      %v982 = vld [vmem:[%s7 + $0x2c0] sm:$0xff]
      %v983 = vld [vmem:[%s7 + $0x2c8] sm:$0xff]
      %v984 = vld [vmem:[%s7 + $0x2d0] sm:$0xff]
      %v985 = vld [vmem:[%s7 + $0x2d8] sm:$0xff]
      %v986 = vld [vmem:[%s7 + $0x2e0] sm:$0xff]
      %v987 = vld [vmem:[%s7 + $0x2e8] sm:$0xff]
      %v988 = vld [vmem:[%s7 + $0x2f0] sm:$0xff]
      %v989 = vld [vmem:[%s7 + $0x2f8] sm:$0xff]
      %v990 = vld [vmem:[%s8] sm:$0x1]
      %v992 = vperm.slane %v990, 0
      %994 = vmatpush.msra.mxu0 %v909
      %995 = vmatpush.msra.mxu0 %v908
      %996 = vmatpush.msra.mxu0 %v907
      %997 = vmatpush.msra.mxu0 %v906
      %998 = vmatpush.msra.mxu0 %v905
      %999 = vmatpush.msra.mxu0 %v904
      %1000 = vmatpush.msra.mxu0 %v903
      %1001 = vmatpush.msra.mxu0 %v902
      %1002 = vmatpush.msra.mxu0 %v901
      %1003 = vmatpush.msra.mxu0 %v900
      %1004 = vmatpush.msra.mxu0 %v899
      %1005 = vmatpush.msra.mxu0 %v898
      %1006 = vmatpush.msra.mxu0 %v897
      %1007 = vmatpush.msra.mxu0 %v896
      %1008 = vmatpush.msra.mxu0 %v895
      %1009 = vmatpush.msra.mxu0 %v894
      %1010 = vmatmul.f32.gmra.mxu0 %v888
      %v1011 = vpop.f32.mrf.mxu0
      %v1012 = vadd.f32 %v992, %v1011
      %1013 = vdwg.mxu0
      %1014 = vmatpush.msra.mxu0 %v925
      %1015 = vmatpush.msra.mxu0 %v924
      %1016 = vmatpush.msra.mxu0 %v923
      %1017 = vmatpush.msra.mxu0 %v922
      %1018 = vmatpush.msra.mxu0 %v921
      %1019 = vmatpush.msra.mxu0 %v920
      %1020 = vmatpush.msra.mxu0 %v919
      %1021 = vmatpush.msra.mxu0 %v918
      %1022 = vmatpush.msra.mxu0 %v917
      %1023 = vmatpush.msra.mxu0 %v916
      %1024 = vmatpush.msra.mxu0 %v915
      %1025 = vmatpush.msra.mxu0 %v914
      %1026 = vmatpush.msra.mxu0 %v913
      %1027 = vmatpush.msra.mxu0 %v912
      %1028 = vmatpush.msra.mxu0 %v911
      %1029 = vmatpush.msra.mxu0 %v910
      %1030 = vmatmul.f32.gmra.mxu0 %v889
      %v1031 = vpop.f32.mrf.mxu0
      %v1032 = vadd.f32 %v1012, %v1031
      %1033 = vdwg.mxu0
      %1034 = vmatpush.msra.mxu0 %v941
      %1035 = vmatpush.msra.mxu0 %v940
      %1036 = vmatpush.msra.mxu0 %v939
      %1037 = vmatpush.msra.mxu0 %v938
      %1038 = vmatpush.msra.mxu0 %v937
      %1039 = vmatpush.msra.mxu0 %v936
      %1040 = vmatpush.msra.mxu0 %v935
      %1041 = vmatpush.msra.mxu0 %v934
      %1042 = vmatpush.msra.mxu0 %v933
      %1043 = vmatpush.msra.mxu0 %v932
      %1044 = vmatpush.msra.mxu0 %v931
      %1045 = vmatpush.msra.mxu0 %v930
      %1046 = vmatpush.msra.mxu0 %v929
      %1047 = vmatpush.msra.mxu0 %v928
      %1048 = vmatpush.msra.mxu0 %v927
      %1049 = vmatpush.msra.mxu0 %v926
      %1050 = vmatmul.f32.gmra.mxu0 %v890
      %v1051 = vpop.f32.mrf.mxu0
      %v1052 = vadd.f32 %v1032, %v1051
      %1053 = vdwg.mxu0
      %1054 = vmatpush.msra.mxu0 %v957
      %1055 = vmatpush.msra.mxu0 %v956
      %1056 = vmatpush.msra.mxu0 %v955
      %1057 = vmatpush.msra.mxu0 %v954
      %1058 = vmatpush.msra.mxu0 %v953
      %1059 = vmatpush.msra.mxu0 %v952
      %1060 = vmatpush.msra.mxu0 %v951
      %1061 = vmatpush.msra.mxu0 %v950
      %1062 = vmatpush.msra.mxu0 %v949
      %1063 = vmatpush.msra.mxu0 %v948
      %1064 = vmatpush.msra.mxu0 %v947
      %1065 = vmatpush.msra.mxu0 %v946
      %1066 = vmatpush.msra.mxu0 %v945
      %1067 = vmatpush.msra.mxu0 %v944
      %1068 = vmatpush.msra.mxu0 %v943
      %1069 = vmatpush.msra.mxu0 %v942
      %1070 = vmatmul.f32.gmra.mxu0 %v891
      %v1071 = vpop.f32.mrf.mxu0
      %v1072 = vadd.f32 %v1052, %v1071
      %1073 = vdwg.mxu0
      %1074 = vmatpush.msra.mxu0 %v973
      %1075 = vmatpush.msra.mxu0 %v972
      %1076 = vmatpush.msra.mxu0 %v971
      %1077 = vmatpush.msra.mxu0 %v970
      %1078 = vmatpush.msra.mxu0 %v969
      %1079 = vmatpush.msra.mxu0 %v968
      %1080 = vmatpush.msra.mxu0 %v967
      %1081 = vmatpush.msra.mxu0 %v966
      %1082 = vmatpush.msra.mxu0 %v965
      %1083 = vmatpush.msra.mxu0 %v964
      %1084 = vmatpush.msra.mxu0 %v963
      %1085 = vmatpush.msra.mxu0 %v962
      %1086 = vmatpush.msra.mxu0 %v961
      %1087 = vmatpush.msra.mxu0 %v960
      %1088 = vmatpush.msra.mxu0 %v959
      %1089 = vmatpush.msra.mxu0 %v958
      %1090 = vmatmul.f32.gmra.mxu0 %v892
      %v1091 = vpop.f32.mrf.mxu0
      %v1092 = vadd.f32 %v1072, %v1091
      %1093 = vdwg.mxu0
      %1094 = vmatpush.msra.mxu0 %v989
      %1095 = vmatpush.msra.mxu0 %v988
      %1096 = vmatpush.msra.mxu0 %v987
      %1097 = vmatpush.msra.mxu0 %v986
      %1098 = vmatpush.msra.mxu0 %v985
      %1099 = vmatpush.msra.mxu0 %v984
      %1100 = vmatpush.msra.mxu0 %v983
      %1101 = vmatpush.msra.mxu0 %v982
      %1102 = vmatpush.msra.mxu0 %v981
      %1103 = vmatpush.msra.mxu0 %v980
      %1104 = vmatpush.msra.mxu0 %v979
      %1105 = vmatpush.msra.mxu0 %v978
      %1106 = vmatpush.msra.mxu0 %v977
      %1107 = vmatpush.msra.mxu0 %v976
      %1108 = vmatpush.msra.mxu0 %v975
      %1109 = vmatpush.msra.mxu0 %v974
      %1110 = vmatmul.f32.gmra.mxu0 %v893
      %v1111 = vpop.f32.mrf.mxu0
      %v1112 = vadd.f32 %v1092, %v1111
      %1113 = vdwg.mxu0
      %v1114 = vmax.f32 %v1112, 0.0
      %vm1115 = vcmask 122880
      %1116 = vst.msk [vmem:[#allocation6] sm:$0x1] %vm1115, 0.0
      %1117 = vst.msk [vmem:[#allocation6 + $0x9] sm:$0x1] %vm1115, 0.0
      %1118 = vst.msk [vmem:[#allocation6 + $0x1] sm:$0xff] %vm530, %v1114
      %v1119 = vld [vmem:[#allocation6] sm:$0xff]
      %1120 = vst.msk [vmem:[#allocation7] sm:$0xff] %vm530, %v1119
      %v1121 = vld [vmem:[#allocation6 + $0x1] sm:$0xff]
      %1123 = vrot.lane.b32.xlu0 %v1121, 16
      %v1124 = vpop.permute.xlu0 %1123
      %1126 = vst.msk [vmem:[#allocation7] sm:$0xff] %vm565, %v1124
      %v1127 = vld [vmem:[#allocation6 + $0x2] sm:$0xff]
      %1129 = vrot.lane.b32.xlu0 %v1127, 32
      %v1130 = vpop.permute.xlu0 %1129
      %1132 = vst.msk [vmem:[#allocation7] sm:$0xff] %vm572, %v1130
      %v1133 = vld [vmem:[#allocation7] sm:$0xff]
      %v1134 = vld [vmem:[%s9] sm:$0xff]
      %v1135 = vld [vmem:[%s9 + $0x8] sm:$0xff]
      %v1136 = vld [vmem:[%s9 + $0x10] sm:$0xff]
      %v1137 = vld [vmem:[%s9 + $0x18] sm:$0xff]
      %v1138 = vld [vmem:[%s9 + $0x20] sm:$0xff]
      %v1139 = vld [vmem:[%s9 + $0x28] sm:$0xff]
      %v1140 = vld [vmem:[%s10] sm:$0x1]
      %v1142 = vperm.slane %v1140, 0
      %vm1144 = vcmask 392192
      %v1146 = vsel %vm1144, %v1133, 0
      %1148 = vmatpush.msra.mxu0 0.0
      %1149 = vmatpush.msra.mxu0 0.0
      %1150 = vmatpush.msra.mxu0 0.0
      %1151 = vmatpush.msra.mxu0 0.0
      %1152 = vmatpush.msra.mxu0 0.0
      %1153 = vmatpush.msra.mxu0 0.0
      %1154 = vmatpush.msra.mxu0 0.0
      %1155 = vmatpush.msra.mxu0 0.0
      %1156 = vmatpush.msra.mxu0 0.0
      %1157 = vmatpush.msra.mxu0 0.0
      %1158 = vmatpush.msra.mxu0 %v1139
      %1159 = vmatpush.msra.mxu0 %v1138
      %1160 = vmatpush.msra.mxu0 %v1137
      %1161 = vmatpush.msra.mxu0 %v1136
      %1162 = vmatpush.msra.mxu0 %v1135
      %1163 = vmatpush.msra.mxu0 %v1134
      %1164 = vmatmul.f32.gmra.mxu0 %v1146
      %v1165 = vpop.f32.mrf.mxu0
      %v1166 = vadd.f32 %v1142, %v1165
      %1167 = vdwg.mxu0
      %v1168 = vadd.f32 %v1166, %v554
      %v1169 = vld [vmem:[%s11] sm:$0xff]
      %v1170 = vld [vmem:[%s11 + $0x8] sm:$0xff]
      %v1171 = vld [vmem:[%s12] sm:$0x1]
      %v1173 = vperm.slane %v1171, 0
      %v1176 = vsel %vm530, %v1168, 0
      %1178 = vmatpush.msra.mxu0 0.0
      %1179 = vmatpush.msra.mxu0 0.0
      %1180 = vmatpush.msra.mxu0 0.0
      %1181 = vmatpush.msra.mxu0 0.0
      %1182 = vmatpush.msra.mxu0 0.0
      %1183 = vmatpush.msra.mxu0 0.0
      %1184 = vmatpush.msra.mxu0 0.0
      %1185 = vmatpush.msra.mxu0 0.0
      %1186 = vmatpush.msra.mxu0 0.0
      %1187 = vmatpush.msra.mxu0 0.0
      %1188 = vmatpush.msra.mxu0 0.0
      %1189 = vmatpush.msra.mxu0 0.0
      %1190 = vmatpush.msra.mxu0 0.0
      %1191 = vmatpush.msra.mxu0 0.0
      %1192 = vmatpush.msra.mxu0 %v1170
      %1193 = vmatpush.msra.mxu0 %v1169
      %1194 = vmatmul.f32.gmra.mxu0 %v1176
      %v1195 = vpop.f32.mrf.mxu0
      %v1196 = vadd.f32 %v1173, %v1195
      %1197 = vdwg.mxu0
      %v1198 = vmax.f32 %v1196, 0.0
      %v1199 = vxor.u32 %v1196, 2147483648
      %v1200 = vmul.f32 %v1199, 1.442695
      %v1201 = vpow.pop %v1200
      %v1202 = vadd.f32 %v1201, 1.0
      %v1203 = vrcp.pop %v1202
      %v1204 = vmul.f32 %v1202, %v1203
      %v1205 = vsub.f32 1.0, %v1204
      %v1206 = vmul.f32 %v1203, %v1205
      %v1207 = vadd.f32 %v1203, %v1206
      %vm1208 = vweird.f32 %v1202
      %vm1209 = vweird.f32 %v1203
      %vm1210 = vmor %vm1208, %vm1209
      %v1211 = vsel %vm1210, %v1203, %v1207
      %v1212 = vand.u32 2147483647, %v1202
      %vm1213 = vcmp.eq.f32.partialorder %v1212, 8.507059e+37
      %v1214 = vand.u32 %v1202, 2147483648
      %v1215 = vor.u32 1.1754944e-38, %v1214
      %v1216 = vsel %vm1213, %v1215, %v1211
      %v1217 = vmul.f32 1.0, %v1216
      %1219 = vrot.lane.b32.xlu0 %v1217, 112
      %v1220 = vpop.permute.xlu0 %1219
      %v1222 = vmul.f32 %v1198, %v1220
      %v1223 = vsub.f32 1.0, %v1217
      %1225 = vrot.lane.b32.xlu0 %v1223, 112
      %v1226 = vpop.permute.xlu0 %1225
      %v1228 = vmul.f32 %v1168, %v1226
      %v1229 = vadd.f32 %v1222, %v1228
      %s1230 = scalar_lea.vmem %s11, 16
      %v1231 = vld [vmem:[%s1230] sm:$0xff]
      %v1232 = vld [vmem:[%s1230 + $0x8] sm:$0xff]
      %s1233 = scalar_lea.vmem %s12, 1
      %v1234 = vld [vmem:[%s1233] sm:$0x1]
      %v1236 = vperm.slane %v1234, 0
      %v1239 = vsel %vm530, %v1229, 0
      %1241 = vmatpush.msra.mxu0 0.0
      %1242 = vmatpush.msra.mxu0 0.0
      %1243 = vmatpush.msra.mxu0 0.0
      %1244 = vmatpush.msra.mxu0 0.0
      %1245 = vmatpush.msra.mxu0 0.0
      %1246 = vmatpush.msra.mxu0 0.0
      %1247 = vmatpush.msra.mxu0 0.0
      %1248 = vmatpush.msra.mxu0 0.0
      %1249 = vmatpush.msra.mxu0 0.0
      %1250 = vmatpush.msra.mxu0 0.0
      %1251 = vmatpush.msra.mxu0 0.0
      %1252 = vmatpush.msra.mxu0 0.0
      %1253 = vmatpush.msra.mxu0 0.0
      %1254 = vmatpush.msra.mxu0 0.0
      %1255 = vmatpush.msra.mxu0 %v1232
      %1256 = vmatpush.msra.mxu0 %v1231
      %1257 = vmatmul.f32.gmra.mxu0 %v1239
      %v1258 = vpop.f32.mrf.mxu0
      %v1259 = vadd.f32 %v1236, %v1258
      %1260 = vdwg.mxu0
      %v1261 = vmax.f32 %v1259, 0.0
      %v1262 = vxor.u32 %v1259, 2147483648
      %v1263 = vmul.f32 %v1262, 1.442695
      %v1264 = vpow.pop %v1263
      %v1265 = vadd.f32 %v1264, 1.0
      %v1266 = vrcp.pop %v1265
      %v1267 = vmul.f32 %v1265, %v1266
      %v1268 = vsub.f32 1.0, %v1267
      %v1269 = vmul.f32 %v1266, %v1268
      %v1270 = vadd.f32 %v1266, %v1269
      %vm1271 = vweird.f32 %v1265
      %vm1272 = vweird.f32 %v1266
      %vm1273 = vmor %vm1271, %vm1272
      %v1274 = vsel %vm1273, %v1266, %v1270
      %v1275 = vand.u32 2147483647, %v1265
      %vm1276 = vcmp.eq.f32.partialorder %v1275, 8.507059e+37
      %v1277 = vand.u32 %v1265, 2147483648
      %v1278 = vor.u32 1.1754944e-38, %v1277
      %v1279 = vsel %vm1276, %v1278, %v1274
      %v1280 = vmul.f32 1.0, %v1279
      %1282 = vrot.lane.b32.xlu0 %v1280, 112
      %v1283 = vpop.permute.xlu0 %1282
      %v1285 = vmul.f32 %v1261, %v1283
      %v1286 = vsub.f32 1.0, %v1280
      %1288 = vrot.lane.b32.xlu0 %v1286, 112
      %v1289 = vpop.permute.xlu0 %1288
      %v1291 = vmul.f32 %v1229, %v1289
      %v1292 = vadd.f32 %v1285, %v1291
      %s1293 = scalar_lea.vmem %s11, 32
      %v1294 = vld [vmem:[%s1293] sm:$0xff]
      %v1295 = vld [vmem:[%s1293 + $0x8] sm:$0xff]
      %s1296 = scalar_lea.vmem %s12, 2
      %v1297 = vld [vmem:[%s1296] sm:$0x1]
      %v1299 = vperm.slane %v1297, 0
      %v1302 = vsel %vm530, %v1292, 0
      %1304 = vmatpush.msra.mxu0 0.0
      %1305 = vmatpush.msra.mxu0 0.0
      %1306 = vmatpush.msra.mxu0 0.0
      %1307 = vmatpush.msra.mxu0 0.0
      %1308 = vmatpush.msra.mxu0 0.0
      %1309 = vmatpush.msra.mxu0 0.0
      %1310 = vmatpush.msra.mxu0 0.0
      %1311 = vmatpush.msra.mxu0 0.0
      %1312 = vmatpush.msra.mxu0 0.0
      %1313 = vmatpush.msra.mxu0 0.0
      %1314 = vmatpush.msra.mxu0 0.0
      %1315 = vmatpush.msra.mxu0 0.0
      %1316 = vmatpush.msra.mxu0 0.0
      %1317 = vmatpush.msra.mxu0 0.0
      %1318 = vmatpush.msra.mxu0 %v1295
      %1319 = vmatpush.msra.mxu0 %v1294
      %1320 = vmatmul.f32.gmra.mxu0 %v1302
      %v1321 = vpop.f32.mrf.mxu0
      %v1322 = vadd.f32 %v1299, %v1321
      %1323 = vdwg.mxu0
      %v1324 = vmax.f32 %v1322, 0.0
      %v1325 = vxor.u32 %v1322, 2147483648
      %v1326 = vmul.f32 %v1325, 1.442695
      %v1327 = vpow.pop %v1326
      %v1328 = vadd.f32 %v1327, 1.0
      %v1329 = vrcp.pop %v1328
      %v1330 = vmul.f32 %v1328, %v1329
      %v1331 = vsub.f32 1.0, %v1330
      %v1332 = vmul.f32 %v1329, %v1331
      %v1333 = vadd.f32 %v1329, %v1332
      %vm1334 = vweird.f32 %v1328
      %vm1335 = vweird.f32 %v1329
      %vm1336 = vmor %vm1334, %vm1335
      %v1337 = vsel %vm1336, %v1329, %v1333
      %v1338 = vand.u32 2147483647, %v1328
      %vm1339 = vcmp.eq.f32.partialorder %v1338, 8.507059e+37
      %v1340 = vand.u32 %v1328, 2147483648
      %v1341 = vor.u32 1.1754944e-38, %v1340
      %v1342 = vsel %vm1339, %v1341, %v1337
      %v1343 = vmul.f32 1.0, %v1342
      %1345 = vrot.lane.b32.xlu0 %v1343, 112
      %v1346 = vpop.permute.xlu0 %1345
      %v1348 = vmul.f32 %v1324, %v1346
      %v1349 = vsub.f32 1.0, %v1343
      %1351 = vrot.lane.b32.xlu0 %v1349, 112
      %v1352 = vpop.permute.xlu0 %1351
      %v1354 = vmul.f32 %v1292, %v1352
      %v1355 = vadd.f32 %v1348, %v1354
      %s1356 = scalar_lea.vmem %s11, 48
      %v1357 = vld [vmem:[%s1356] sm:$0xff]
      %v1358 = vld [vmem:[%s1356 + $0x8] sm:$0xff]
      %s1359 = scalar_lea.vmem %s12, 3
      %v1360 = vld [vmem:[%s1359] sm:$0x1]
      %v1362 = vperm.slane %v1360, 0
      %v1365 = vsel %vm530, %v1355, 0
      %1367 = vmatpush.msra.mxu0 0.0
      %1368 = vmatpush.msra.mxu0 0.0
      %1369 = vmatpush.msra.mxu0 0.0
      %1370 = vmatpush.msra.mxu0 0.0
      %1371 = vmatpush.msra.mxu0 0.0
      %1372 = vmatpush.msra.mxu0 0.0
      %1373 = vmatpush.msra.mxu0 0.0
      %1374 = vmatpush.msra.mxu0 0.0
      %1375 = vmatpush.msra.mxu0 0.0
      %1376 = vmatpush.msra.mxu0 0.0
      %1377 = vmatpush.msra.mxu0 0.0
      %1378 = vmatpush.msra.mxu0 0.0
      %1379 = vmatpush.msra.mxu0 0.0
      %1380 = vmatpush.msra.mxu0 0.0
      %1381 = vmatpush.msra.mxu0 %v1358
      %1382 = vmatpush.msra.mxu0 %v1357
      %1383 = vmatmul.f32.gmra.mxu0 %v1365
      %v1384 = vpop.f32.mrf.mxu0
      %v1385 = vadd.f32 %v1362, %v1384
      %1386 = vdwg.mxu0
      %v1387 = vmax.f32 %v1385, 0.0
      %v1388 = vxor.u32 %v1385, 2147483648
      %v1389 = vmul.f32 %v1388, 1.442695
      %v1390 = vpow.pop %v1389
      %v1391 = vadd.f32 %v1390, 1.0
      %v1392 = vrcp.pop %v1391
      %v1393 = vmul.f32 %v1391, %v1392
      %v1394 = vsub.f32 1.0, %v1393
      %v1395 = vmul.f32 %v1392, %v1394
      %v1396 = vadd.f32 %v1392, %v1395
      %vm1397 = vweird.f32 %v1391
      %vm1398 = vweird.f32 %v1392
      %vm1399 = vmor %vm1397, %vm1398
      %v1400 = vsel %vm1399, %v1392, %v1396
      %v1401 = vand.u32 2147483647, %v1391
      %vm1402 = vcmp.eq.f32.partialorder %v1401, 8.507059e+37
      %v1403 = vand.u32 %v1391, 2147483648
      %v1404 = vor.u32 1.1754944e-38, %v1403
      %v1405 = vsel %vm1402, %v1404, %v1400
      %v1406 = vmul.f32 1.0, %v1405
      %1408 = vrot.lane.b32.xlu0 %v1406, 112
      %v1409 = vpop.permute.xlu0 %1408
      %v1411 = vmul.f32 %v1387, %v1409
      %v1412 = vsub.f32 1.0, %v1406
      %1414 = vrot.lane.b32.xlu0 %v1412, 112
      %v1415 = vpop.permute.xlu0 %1414
      %v1417 = vmul.f32 %v1355, %v1415
      %v1418 = vadd.f32 %v1411, %v1417
      %v1419 = vld [vmem:[%s13] sm:$0xff]
      %v1420 = vld [vmem:[%s13 + $0x8] sm:$0xff]
      %v1421 = vld [vmem:[%s14] sm:$0x1]
      %v1423 = vperm.slane %v1421, 0
      %v1426 = vsel %vm530, %v1418, 0
      %1428 = vmatpush.msra.mxu0 0.0
      %1429 = vmatpush.msra.mxu0 0.0
      %1430 = vmatpush.msra.mxu0 0.0
      %1431 = vmatpush.msra.mxu0 0.0
      %1432 = vmatpush.msra.mxu0 0.0
      %1433 = vmatpush.msra.mxu0 0.0
      %1434 = vmatpush.msra.mxu0 0.0
      %1435 = vmatpush.msra.mxu0 0.0
      %1436 = vmatpush.msra.mxu0 0.0
      %1437 = vmatpush.msra.mxu0 0.0
      %1438 = vmatpush.msra.mxu0 0.0
      %1439 = vmatpush.msra.mxu0 0.0
      %1440 = vmatpush.msra.mxu0 0.0
      %1441 = vmatpush.msra.mxu0 0.0
      %1442 = vmatpush.msra.mxu0 %v1420
      %1443 = vmatpush.msra.mxu0 %v1419
      %1444 = vmatmul.f32.gmra.mxu0 %v1426
      %v1445 = vpop.f32.mrf.mxu0
      %v1446 = vadd.f32 %v1423, %v1445
      %1447 = vdwg.mxu0
      %vm1448 = vcmask 785408
      %1449 = vst.msk [vmem:[%s489] sm:$0xff] %vm1448, %v1446
      %p1450 = scmp.lt.s32.totalorder %s26, 1
      %s1451 = scalar_select %p1450, %s26, 1
      %s1452 = smul.addr %s1451, 8
      %s1453 = scalar_lea.vmem %s15, %s1452
      // Predicated region
      $region81: #{context_encoder.2} parent=79 // pred_check
        %p1454 = pneg %p364
      $region82: #{context_encoder.2} parent=79 // pred_check_branch
        %1456 = sbr.rel (%p1454) target = $region84
      $region83: #{context_encoder.2} parent=79 // pred_region
        _
      $region84: #{context_encoder.2} parent=79 // pred_fallthru
        _
    $region80: #{context_encoder.2} parent=5 // pred_fallthru
      _
    %p1457 = scmp.le.s32.totalorder 2, %s21
    // Predicated region
    $region85: #{context_encoder.2} parent=5 // pred_check
      %p1458 = pneg %p1457
    $region86: #{context_encoder.2} parent=5 // pred_check_branch
      %1460 = sbr.rel (%p1458) target = $region88
    $region87: #{context_encoder.2} parent=5 // pred_region
      %s1461 = ssub.s32 %s21, 2
      // Predicated region
      $region89: #{context_encoder.2} parent=87 // pred_check
        %p1462 = pneg %p370
      $region90: #{context_encoder.2} parent=87 // pred_check_branch
        %1464 = sbr.rel (%p1462) target = $region92
      $region91: #{context_encoder.2} parent=87 // pred_region
        %p1465 = scmp.lt.s32.totalorder %s27, 1
        %s1466 = scalar_select %p1465, %s27, 1
        %s1467 = smul.addr %s1466, 8
        %s1468 = scalar_lea.vmem %s15, %s1467
      $region92: #{context_encoder.2} parent=87 // pred_fallthru
        _
    $region88: #{context_encoder.2} parent=5 // pred_fallthru
      _
  $region6: #{context_encoder.2} parent=0 // loop_footer
    %s25 = sadd.s32 1, %s21
  $region7: #{context_encoder.2} parent=0 // loop_footer_branch
    %20 = sbr.rel target = $region3
  $region8: #{context_encoder.2} parent=0 // loop_exit
    _

</llo_original>
